<compile_context>
chip_gen: v5e
topology: v5e:2x2
jax: 0.10.0
libtpu: 0.0.40
codegen_flags: <defaults>
</compile_context>

<pallas_src>
import jax
import jax.numpy as jnp
from jax.experimental import pallas as pl
from jax.experimental.pallas import tpu as pltpu


def _round_up(n, m):
    return ((n + m - 1) // m) * m


def _leaky_relu(x, slope=0.2):
    return jnp.where(x > 0, x, slope * x)


def discriminator_kernel(x_ref, w1_ref, b1_ref, w2_ref, b2_ref, w3_ref, b3_ref,
                         o_ref):
    # Layer 1: Linear(896(padded 784) -> 256), bf16 MXU matmul, fp32 accumulate.
    h1 = jnp.dot(x_ref[...], w1_ref[...],
                 preferred_element_type=jnp.float32) + b1_ref[...]
    h1 = _leaky_relu(h1)

    # Layer 2: Linear(256 -> 256), bf16 MXU matmul, fp32 accumulate.
    h2 = jnp.dot(h1.astype(jnp.bfloat16), w2_ref[...],
                 preferred_element_type=jnp.float32) + b2_ref[...]
    h2 = _leaky_relu(h2)

    # Layer 3: Linear(256 -> 1) done on the VPU + lane reduction (XLU) instead
    # of a degenerate N=1 MXU matmul. w3_ref is the (1, 256) row of W3.
    logits = jnp.sum(h2 * w3_ref[...], axis=-1, keepdims=True) + b3_ref[...]

    o_ref[...] = jax.nn.sigmoid(logits).astype(o_ref.dtype)


def discriminator_forward(x, params, *, tb=512):
    """x: [B, 784] float32. Returns [B, 1] float32 probabilities."""
    w1, b1, w2, b2, w3, b3 = params
    B, D = x.shape
    assert D == 784
    H = w1.shape[1]  # 256

    # --- host-side prep (padding + bf16 casts) ---
    D_pad = _round_up(D, 128)                       # 784 -> 896
    tb = _round_up(min(tb, _round_up(B, 128)), 128)  # tile: multiple of 128
    B_pad = _round_up(B, tb)
    grid = (B_pad // tb,)

    x_p = jnp.pad(x, ((0, B_pad - B), (0, D_pad - D))).astype(jnp.bfloat16)
    w1_p = jnp.pad(w1, ((0, D_pad - D), (0, 0))).astype(jnp.bfloat16)
    w2_b = w2.astype(jnp.bfloat16)
    b1_f = b1.astype(jnp.float32)
    b2_f = b2.astype(jnp.float32)
    w3_row = w3.T.astype(jnp.float32)               # (1, 256)
    b3_f = b3.astype(jnp.float32)                   # (1, 1)

    # Weights / biases: full-array blocks, constant block index across grid.
    w_spec = lambda shape: pl.BlockSpec(shape, lambda i: (0, 0))

    flops = 2 * B_pad * (D_pad * H + H * H + H)
    bytes_accessed = (x_p.size * 2 + w1_p.size * 2 + w2_b.size * 2 +
                      (b1_f.size + b2_f.size + w3_row.size + b3_f.size) * 4 +
                      B_pad * 4)

    out = pl.pallas_call(
        discriminator_kernel,
        out_shape=jax.ShapeDtypeStruct((B_pad, 1), jnp.float32),
        grid_spec=pltpu.PrefetchScalarGridSpec(
            num_scalar_prefetch=0,
            grid=grid,
            in_specs=[
                pl.BlockSpec((tb, D_pad), lambda i: (i, 0)),  # x tile (bf16)
                w_spec((D_pad, H)),                            # W1 (bf16)
                w_spec((1, H)),                                # b1 (f32)
                w_spec((H, H)),                                # W2 (bf16)
                w_spec((1, H)),                                # b2 (f32)
                w_spec((1, H)),                                # W3 row (f32)
                w_spec((1, 1)),                                # b3 (f32)
            ],
            out_specs=pl.BlockSpec((tb, 1), lambda i: (i, 0)),
        ),
        compiler_params=pltpu.CompilerParams(
            dimension_semantics=("parallel",)),
        cost_estimate=pl.CostEstimate(
            flops=flops,
            transcendentals=B_pad,
            bytes_accessed=bytes_accessed),
    )(x_p, w1_p, b1_f, w2_b, b2_f, w3_row, b3_f)

    return out[:B]


def init_params(key):
    """Deterministic synthetic parameters matching nn.Linear shapes."""
    k1, k2, k3, k4, k5, k6 = jax.random.split(key, 6)
    # PyTorch Linear weight is [out, in]; we store [in, out] for x @ W.
    w1 = jax.random.normal(k1, (784, 256), jnp.float32) * 0.05
    b1 = jax.random.normal(k2, (1, 256), jnp.float32) * 0.01
    w2 = jax.random.normal(k3, (256, 256), jnp.float32) * 0.05
    b2 = jax.random.normal(k4, (1, 256), jnp.float32) * 0.01
    w3 = jax.random.normal(k5, (256, 1), jnp.float32) * 0.05
    b3 = jax.random.normal(k6, (1, 1), jnp.float32) * 0.01
    return (w1, b1, w2, b2, w3, b3)


def reference_forward(x, params):
    w1, b1, w2, b2, w3, b3 = params
    h1 = jax.nn.leaky_relu(x @ w1 + b1, 0.2)
    h2 = jax.nn.leaky_relu(h1 @ w2 + b2, 0.2)
    return jax.nn.sigmoid(h2 @ w3 + b3)


if __name__ == "__main__":
    key = jax.random.PRNGKey(0)
    kx, kp, kx2 = jax.random.split(key, 3)
    params = init_params(kp)

    # Small primary test (single tile, padded batch).
    B = 16
    x = jax.random.normal(kx, (B, 784), jnp.float32)
    out = jax.block_until_ready(discriminator_forward(x, params))
    ref = reference_forward(x, params)
    assert out.shape == (B, 1)
    # bf16 matmul operands vs fp32 reference -> loose tolerance on the [0,1] output.
    assert jnp.allclose(out, ref, atol=3e-2), float(jnp.max(jnp.abs(out - ref)))

    # Secondary test: ragged batch with multiple grid steps.
    B2 = 272
    x2 = jax.random.normal(kx2, (B2, 784), jnp.float32)
    out2 = jax.block_until_ready(discriminator_forward(x2, params, tb=128))
    ref2 = reference_forward(x2, params)
    assert out2.shape == (B2, 1)
    assert jnp.allclose(out2, ref2, atol=3e-2), float(jnp.max(jnp.abs(out2 - ref2)))

    print("KERNEL_OK")
</pallas_src>

<mosaic_0001>
module attributes {stable_mosaic.version = 11 : i64} {
  func.func @discriminator_kernel(%arg0: i32, %arg1: memref<128x896xbf16, #tpu.memory_space<vmem>>, %arg2: memref<896x256xbf16, #tpu.memory_space<vmem>>, %arg3: memref<1x256xf32, #tpu.memory_space<vmem>>, %arg4: memref<256x256xbf16, #tpu.memory_space<vmem>>, %arg5: memref<1x256xf32, #tpu.memory_space<vmem>>, %arg6: memref<1x256xf32, #tpu.memory_space<vmem>>, %arg7: memref<1x1xf32, #tpu.memory_space<vmem>>, %arg8: memref<128x1xf32, #tpu.memory_space<vmem>>) attributes {dimension_semantics = [#tpu.dimension_semantics<parallel>], iteration_bounds = array<i64: 1>, scalar_prefetch = 0 : i64, scratch_operands = 0 : i64, tpu.core_type = #tpu.core_type<tc>, window_params = [{transform_indices = @transform_0, window_bounds = array<i64: 128, 896>}, {pipeline_mode = #tpu.pipeline_mode<synchronous>, transform_indices = @transform_1, window_bounds = array<i64: 896, 256>}, {pipeline_mode = #tpu.pipeline_mode<synchronous>, transform_indices = @transform_2, window_bounds = array<i64: 1, 256>}, {pipeline_mode = #tpu.pipeline_mode<synchronous>, transform_indices = @transform_3, window_bounds = array<i64: 256, 256>}, {pipeline_mode = #tpu.pipeline_mode<synchronous>, transform_indices = @transform_4, window_bounds = array<i64: 1, 256>}, {pipeline_mode = #tpu.pipeline_mode<synchronous>, transform_indices = @transform_5, window_bounds = array<i64: 1, 256>}, {pipeline_mode = #tpu.pipeline_mode<synchronous>, transform_indices = @transform_6, window_bounds = array<i64: 1, 1>}, {transform_indices = @transform_7, window_bounds = array<i64: 128, 1>}]} {
    %c0 = arith.constant 0 : index
    %c0_0 = arith.constant 0 : index
    %0 = vector.load %arg1[%c0, %c0_0] : memref<128x896xbf16, #tpu.memory_space<vmem>>, vector<128x896xbf16>
    %c0_1 = arith.constant 0 : index
    %c0_2 = arith.constant 0 : index
    %1 = vector.load %arg2[%c0_1, %c0_2] : memref<896x256xbf16, #tpu.memory_space<vmem>>, vector<896x256xbf16>
    %cst = arith.constant dense<0.000000e+00> : vector<128x256xf32>
    %2 = tpu.matmul %0, %1, %cst {dimension_numbers = #tpu.dot_dimension_numbers<[1], [0], [0], [1], [0, 0, 1, 1], [], []>} : vector<128x896xbf16>, vector<896x256xbf16>, vector<128x256xf32> -> vector<128x256xf32>
    %c0_3 = arith.constant 0 : index
    %c0_4 = arith.constant 0 : index
    %3 = vector.load %arg3[%c0_3, %c0_4] : memref<1x256xf32, #tpu.memory_space<vmem>>, vector<1x256xf32>
    %4 = vector.broadcast %3 : vector<1x256xf32> to vector<128x256xf32>
    %5 = arith.addf %2, %4 : vector<128x256xf32>
    %cst_5 = arith.constant 0.000000e+00 : f32
    %6 = vector.broadcast %cst_5 : f32 to vector<128x256xf32>
    %7 = arith.cmpf ogt, %5, %6 : vector<128x256xf32>
    %cst_6 = arith.constant 2.000000e-01 : f32
    %8 = vector.broadcast %cst_6 : f32 to vector<128x256xf32>
    %9 = arith.mulf %8, %5 : vector<128x256xf32>
    %10 = arith.select %7, %5, %9 : vector<128x256xi1>, vector<128x256xf32>
    %11 = arith.truncf %10 : vector<128x256xf32> to vector<128x256xbf16>
    %c0_7 = arith.constant 0 : index
    %c0_8 = arith.constant 0 : index
    %12 = vector.load %arg4[%c0_7, %c0_8] : memref<256x256xbf16, #tpu.memory_space<vmem>>, vector<256x256xbf16>
    %cst_9 = arith.constant dense<0.000000e+00> : vector<128x256xf32>
    %13 = tpu.matmul %11, %12, %cst_9 {dimension_numbers = #tpu.dot_dimension_numbers<[1], [0], [0], [1], [0, 0, 1, 1], [], []>} : vector<128x256xbf16>, vector<256x256xbf16>, vector<128x256xf32> -> vector<128x256xf32>
    %c0_10 = arith.constant 0 : index
    %c0_11 = arith.constant 0 : index
    %14 = vector.load %arg5[%c0_10, %c0_11] : memref<1x256xf32, #tpu.memory_space<vmem>>, vector<1x256xf32>
    %15 = vector.broadcast %14 : vector<1x256xf32> to vector<128x256xf32>
    %16 = arith.addf %13, %15 : vector<128x256xf32>
    %cst_12 = arith.constant 0.000000e+00 : f32
    %17 = vector.broadcast %cst_12 : f32 to vector<128x256xf32>
    %18 = arith.cmpf ogt, %16, %17 : vector<128x256xf32>
    %cst_13 = arith.constant 2.000000e-01 : f32
    %19 = vector.broadcast %cst_13 : f32 to vector<128x256xf32>
    %20 = arith.mulf %19, %16 : vector<128x256xf32>
    %21 = arith.select %18, %16, %20 : vector<128x256xi1>, vector<128x256xf32>
    %c0_14 = arith.constant 0 : index
    %c0_15 = arith.constant 0 : index
    %22 = vector.load %arg6[%c0_14, %c0_15] : memref<1x256xf32, #tpu.memory_space<vmem>>, vector<1x256xf32>
    %23 = vector.broadcast %22 : vector<1x256xf32> to vector<128x256xf32>
    %24 = arith.mulf %21, %23 : vector<128x256xf32>
    %cst_16 = arith.constant dense<0.000000e+00> : vector<128xf32>
    %25 = vector.multi_reduction <add>, %24, %cst_16 [1] : vector<128x256xf32> to vector<128xf32>
    %26 = vector.shape_cast %25 : vector<128xf32> to vector<128x1xf32>
    %c0_17 = arith.constant 0 : index
    %c0_18 = arith.constant 0 : index
    %27 = vector.load %arg7[%c0_17, %c0_18] : memref<1x1xf32, #tpu.memory_space<vmem>>, vector<1x1xf32>
    %28 = vector.broadcast %27 : vector<1x1xf32> to vector<128x1xf32>
    %29 = arith.addf %26, %28 : vector<128x1xf32>
    %30 = arith.negf %29 : vector<128x1xf32>
    %31 = math.exp %30 : vector<128x1xf32>
    %cst_19 = arith.constant 1.000000e+00 : f32
    %32 = vector.broadcast %cst_19 : f32 to vector<128x1xf32>
    %33 = arith.addf %32, %31 : vector<128x1xf32>
    %34 = arith.divf %32, %33 : vector<128x1xf32>
    %c0_20 = arith.constant 0 : index
    %c0_21 = arith.constant 0 : index
    %35 = vector.load %arg8[%c0_20, %c0_21] : memref<128x1xf32, #tpu.memory_space<vmem>>, vector<128x1xf32>
    tpu.vector_store %arg8[%c0_20, %c0_21], %34 {strides = array<i32>} : memref<128x1xf32, #tpu.memory_space<vmem>>, vector<128x1xf32>,
    return
  }
  func.func @transform_0(%arg0: i32) -> (i32, i32) {
    %c0_i32 = arith.constant 0 : i32
    %c0_i32_0 = arith.constant 0 : i32
    return %arg0, %c0_i32 : i32, i32
  }
  func.func @transform_1(%arg0: i32) -> (i32, i32) {
    %c0_i32 = arith.constant 0 : i32
    %c0_i32_0 = arith.constant 0 : i32
    %c0_i32_1 = arith.constant 0 : i32
    return %c0_i32, %c0_i32_0 : i32, i32
  }
  func.func @transform_2(%arg0: i32) -> (i32, i32) {
    %c0_i32 = arith.constant 0 : i32
    %c0_i32_0 = arith.constant 0 : i32
    %c0_i32_1 = arith.constant 0 : i32
    return %c0_i32, %c0_i32_0 : i32, i32
  }
  func.func @transform_3(%arg0: i32) -> (i32, i32) {
    %c0_i32 = arith.constant 0 : i32
    %c0_i32_0 = arith.constant 0 : i32
    %c0_i32_1 = arith.constant 0 : i32
    return %c0_i32, %c0_i32_0 : i32, i32
  }
  func.func @transform_4(%arg0: i32) -> (i32, i32) {
    %c0_i32 = arith.constant 0 : i32
    %c0_i32_0 = arith.constant 0 : i32
    %c0_i32_1 = arith.constant 0 : i32
    return %c0_i32, %c0_i32_0 : i32, i32
  }
  func.func @transform_5(%arg0: i32) -> (i32, i32) {
    %c0_i32 = arith.constant 0 : i32
    %c0_i32_0 = arith.constant 0 : i32
    %c0_i32_1 = arith.constant 0 : i32
    return %c0_i32, %c0_i32_0 : i32, i32
  }
  func.func @transform_6(%arg0: i32) -> (i32, i32) {
    %c0_i32 = arith.constant 0 : i32
    %c0_i32_0 = arith.constant 0 : i32
    %c0_i32_1 = arith.constant 0 : i32
    return %c0_i32, %c0_i32_0 : i32, i32
  }
  func.func @transform_7(%arg0: i32) -> (i32, i32) {
    %c0_i32 = arith.constant 0 : i32
    %c0_i32_0 = arith.constant 0 : i32
    return %arg0, %c0_i32 : i32, i32
  }
}

</mosaic_0001>

<llo_original>
// kernel: tpu_custom_call.1
$region0: #{tpu_custom_call.1}
  #allocation0 [shape = 'u32[]', space=smem, size = 0x4, offset = 0x4, fixed_abs, tag = 'smem constant byte address 0x4 - core index']
  #allocation1 [shape = 'u32[72,128]{1,0:T(1,128)}', space=vmem, size = 0x9000, scoped, tag = 'internal scratch']
  #allocation2 [shape = 'f32[1,1]{1,0:T(1,128)S(1)}', space=vmem, size = 0x200, scoped, tag = 'scoped memory for tpu_custom_call.1']
  %s0 = inlined_call_operand.hbm [shape: bf16[128,896], index: 0, kind: input, shape index: {}]
  %s1 = inlined_call_operand.hbm [shape: bf16[896,256], index: 1, kind: input, shape index: {}]
  %s2 = inlined_call_operand.vmem [shape: f32[1,256], index: 2, kind: input, shape index: {}]
  %s3 = inlined_call_operand.hbm [shape: bf16[256,256], index: 3, kind: input, shape index: {}]
  %s4 = inlined_call_operand.vmem [shape: f32[1,256], index: 4, kind: input, shape index: {}]
  %s5 = inlined_call_operand.vmem [shape: f32[1,256], index: 5, kind: input, shape index: {}]
  %s6 = inlined_call_operand.<no memory space> [shape: f32[1,1], index: 6, kind: input, shape index: {}]
  %s7 = inlined_call_operand.vmem [shape: f32[128,1], index: 7, kind: output, shape index: {}]
  %s8 = sld [smem:[#allocation0]]
  $region50: #{tpu_custom_call.1} parent=0
    _
  %s10 = ssub.s32 1, %s8
  %s11 = scalar_select 0, %s10, %s8
  %v12 = vstv %s6
  %13 = vst [vmem:[#allocation2] sm:$0x1] %v12
  $region1: #{tpu_custom_call.1} parent=0
    #allocation3 [shape = 'u8[229376]{0}', space=vmem, size = 0x38000, scoped, tag = 'input window, operand 0, single buffered']
    #allocation4 [shape = 's32[1]{0}', space=sflag, size = 0x4, scoped, tag = 'scoped memory for tpu_custom_call.1']
    #allocation5 [shape = 'u8[458752]{0}', space=vmem, size = 0x70000, scoped, tag = 'input window, operand 1, single buffered']
    #allocation6 [shape = 's32[1]{0}', space=sflag, size = 0x4, scoped, tag = 'scoped memory for tpu_custom_call.1']
    #allocation7 [shape = 'u8[131072]{0}', space=vmem, size = 0x20000, scoped, tag = 'input window, operand 3, single buffered']
    %14 = vsyncpa [#allocation4], 0
    %15 = vsyncpa [#allocation6], 0
    // Predicated region
    $region2: #{tpu_custom_call.1} parent=1 // pred_check
      _
    $region3: #{tpu_custom_call.1} parent=1 // pred_check_branch
      %17 = sbr.rel (0) target = $region5
    $region4: #{tpu_custom_call.1} parent=1 // pred_region
      %19 = vsyncadd [#allocation4], 0
      %s20 = sshll.u32 %s0, 4
      %s21 = int_to_ptr.hbm [resolvable:$true] %s20
      %s22 = sshll.u32 [#allocation3], 4
      %s23 = int_to_ptr.vmem [resolvable:$true] %s22
      %28 = dma.hbm_to_vmem [thread:$0]  %s21, 7168, %s23, [#allocation4], 448, 448, 28
    $region5: #{tpu_custom_call.1} parent=1 // pred_fallthru
      _
    // Predicated region
    $region6: #{tpu_custom_call.1} parent=1 // pred_check
      _
    $region7: #{tpu_custom_call.1} parent=1 // pred_check_branch
      %30 = sbr.rel (0) target = $region9
    $region8: #{tpu_custom_call.1} parent=1 // pred_region
      %32 = vsyncadd [#allocation6], 0
      %s33 = sshll.u32 %s1, 4
      %s34 = int_to_ptr.hbm [resolvable:$true] %s33
      %s35 = sshll.u32 [#allocation5], 4
      %s36 = int_to_ptr.vmem [resolvable:$true] %s35
      %41 = dma.hbm_to_vmem [thread:$0]  %s34, 14336, %s36, [#allocation6], 128, 128, 8
    $region9: #{tpu_custom_call.1} parent=1 // pred_fallthru
      _
    // Predicated region
    $region10: #{tpu_custom_call.1} parent=1 // pred_check
      _
    $region11: #{tpu_custom_call.1} parent=1 // pred_check_branch
      %43 = sbr.rel (0) target = $region13
    $region12: #{tpu_custom_call.1} parent=1 // pred_region
      _
    $region13: #{tpu_custom_call.1} parent=1 // pred_fallthru
      _
    // Predicated region
    $region14: #{tpu_custom_call.1} parent=1 // pred_check
      _
    $region15: #{tpu_custom_call.1} parent=1 // pred_check_branch
      %45 = sbr.rel (0) target = $region17
    $region16: #{tpu_custom_call.1} parent=1 // pred_region
      %47 = vsyncadd [#allocation6], 0
      %s48 = sshll.u32 %s3, 4
      %s49 = int_to_ptr.hbm [resolvable:$true] %s48
      %s50 = sshll.u32 [#allocation7], 4
      %s51 = int_to_ptr.vmem [resolvable:$true] %s50
      %56 = dma.hbm_to_vmem [thread:$0]  %s49, 4096, %s51, [#allocation6], 128, 128, 8
    $region17: #{tpu_custom_call.1} parent=1 // pred_fallthru
      _
    // Predicated region
    $region18: #{tpu_custom_call.1} parent=1 // pred_check
      _
    $region19: #{tpu_custom_call.1} parent=1 // pred_check_branch
      %58 = sbr.rel (0) target = $region21
    $region20: #{tpu_custom_call.1} parent=1 // pred_region
      _
    $region21: #{tpu_custom_call.1} parent=1 // pred_fallthru
      _
    // Predicated region
    $region22: #{tpu_custom_call.1} parent=1 // pred_check
      _
    $region23: #{tpu_custom_call.1} parent=1 // pred_check_branch
      %60 = sbr.rel (0) target = $region25
    $region24: #{tpu_custom_call.1} parent=1 // pred_region
      _
    $region25: #{tpu_custom_call.1} parent=1 // pred_fallthru
      _
    // Predicated region
    $region26: #{tpu_custom_call.1} parent=1 // pred_check
      _
    $region27: #{tpu_custom_call.1} parent=1 // pred_check_branch
      %62 = sbr.rel (0) target = $region29
    $region28: #{tpu_custom_call.1} parent=1 // pred_region
      _
    $region29: #{tpu_custom_call.1} parent=1 // pred_fallthru
      _
    // Predicated region
    $region30: #{tpu_custom_call.1} parent=1 // pred_check
      _
    $region31: #{tpu_custom_call.1} parent=1 // pred_check_branch
      %64 = sbr.rel (0) target = $region33
    $region32: #{tpu_custom_call.1} parent=1 // pred_region
      %66 = dma.done [#allocation4], 7168
    $region33: #{tpu_custom_call.1} parent=1 // pred_fallthru
      _
    // Predicated region
    $region34: #{tpu_custom_call.1} parent=1 // pred_check
      _
    $region35: #{tpu_custom_call.1} parent=1 // pred_check_branch
      %68 = sbr.rel (0) target = $region37
    $region36: #{tpu_custom_call.1} parent=1 // pred_region
      %70 = dma.done [#allocation6], 14336
    $region37: #{tpu_custom_call.1} parent=1 // pred_fallthru
      _
    // Predicated region
    $region38: #{tpu_custom_call.1} parent=1 // pred_check
      _
    $region39: #{tpu_custom_call.1} parent=1 // pred_check_branch
      %72 = sbr.rel (0) target = $region41
    $region40: #{tpu_custom_call.1} parent=1 // pred_region
      %74 = dma.done [#allocation6], 4096
    $region41: #{tpu_custom_call.1} parent=1 // pred_fallthru
      _
    %v75 = vld [vmem:[#allocation3] sm:$0xff]
    %v76 = vld [vmem:[#allocation3 + $0x8] sm:$0xff]
    %v77 = vld [vmem:[#allocation3 + $0x10] sm:$0xff]
    %v78 = vld [vmem:[#allocation3 + $0x18] sm:$0xf]
    %v79 = vld [vmem:[#allocation3 + $0x1c] sm:$0xff]
    %v80 = vld [vmem:[#allocation3 + $0x24] sm:$0xff]
    %v81 = vld [vmem:[#allocation3 + $0x2c] sm:$0xff]
    %v82 = vld [vmem:[#allocation3 + $0x34] sm:$0xf]
    %v83 = vld [vmem:[#allocation3 + $0x38] sm:$0xff]
    %v84 = vld [vmem:[#allocation3 + $0x40] sm:$0xff]
    %v85 = vld [vmem:[#allocation3 + $0x48] sm:$0xff]
    %v86 = vld [vmem:[#allocation3 + $0x50] sm:$0xf]
    %v87 = vld [vmem:[#allocation3 + $0x54] sm:$0xff]
    %v88 = vld [vmem:[#allocation3 + $0x5c] sm:$0xff]
    %v89 = vld [vmem:[#allocation3 + $0x64] sm:$0xff]
    %v90 = vld [vmem:[#allocation3 + $0x6c] sm:$0xf]
    %v91 = vld [vmem:[#allocation3 + $0x70] sm:$0xff]
    %v92 = vld [vmem:[#allocation3 + $0x78] sm:$0xff]
    %v93 = vld [vmem:[#allocation3 + $0x80] sm:$0xff]
    %v94 = vld [vmem:[#allocation3 + $0x88] sm:$0xf]
    %v95 = vld [vmem:[#allocation3 + $0x8c] sm:$0xff]
    %v96 = vld [vmem:[#allocation3 + $0x94] sm:$0xff]
    %v97 = vld [vmem:[#allocation3 + $0x9c] sm:$0xff]
    %v98 = vld [vmem:[#allocation3 + $0xa4] sm:$0xf]
    %v99 = vld [vmem:[#allocation3 + $0xa8] sm:$0xff]
    %v100 = vld [vmem:[#allocation3 + $0xb0] sm:$0xff]
    %v101 = vld [vmem:[#allocation3 + $0xb8] sm:$0xff]
    %v102 = vld [vmem:[#allocation3 + $0xc0] sm:$0xf]
    %v103 = vld [vmem:[#allocation3 + $0xc4] sm:$0xff]
    %v104 = vld [vmem:[#allocation3 + $0xcc] sm:$0xff]
    %v105 = vld [vmem:[#allocation3 + $0xd4] sm:$0xff]
    %v106 = vld [vmem:[#allocation3 + $0xdc] sm:$0xf]
    %v107 = vld [vmem:[#allocation3 + $0xe0] sm:$0xff]
    %v108 = vld [vmem:[#allocation3 + $0xe8] sm:$0xff]
    %v109 = vld [vmem:[#allocation3 + $0xf0] sm:$0xff]
    %v110 = vld [vmem:[#allocation3 + $0xf8] sm:$0xf]
    %v111 = vld [vmem:[#allocation3 + $0xfc] sm:$0xff]
    %v112 = vld [vmem:[#allocation3 + $0x104] sm:$0xff]
    %v113 = vld [vmem:[#allocation3 + $0x10c] sm:$0xff]
    %v114 = vld [vmem:[#allocation3 + $0x114] sm:$0xf]
    %v115 = vld [vmem:[#allocation3 + $0x118] sm:$0xff]
    %v116 = vld [vmem:[#allocation3 + $0x120] sm:$0xff]
    %v117 = vld [vmem:[#allocation3 + $0x128] sm:$0xff]
    %v118 = vld [vmem:[#allocation3 + $0x130] sm:$0xf]
    %v119 = vld [vmem:[#allocation3 + $0x134] sm:$0xff]
    %v120 = vld [vmem:[#allocation3 + $0x13c] sm:$0xff]
    %v121 = vld [vmem:[#allocation3 + $0x144] sm:$0xff]
    %v122 = vld [vmem:[#allocation3 + $0x14c] sm:$0xf]
    %v123 = vld [vmem:[#allocation3 + $0x150] sm:$0xff]
    %v124 = vld [vmem:[#allocation3 + $0x158] sm:$0xff]
    %v125 = vld [vmem:[#allocation3 + $0x160] sm:$0xff]
    %v126 = vld [vmem:[#allocation3 + $0x168] sm:$0xf]
    %v127 = vld [vmem:[#allocation3 + $0x16c] sm:$0xff]
    %v128 = vld [vmem:[#allocation3 + $0x174] sm:$0xff]
    %v129 = vld [vmem:[#allocation3 + $0x17c] sm:$0xff]
    %v130 = vld [vmem:[#allocation3 + $0x184] sm:$0xf]
    %v131 = vld [vmem:[#allocation3 + $0x188] sm:$0xff]
    %v132 = vld [vmem:[#allocation3 + $0x190] sm:$0xff]
    %v133 = vld [vmem:[#allocation3 + $0x198] sm:$0xff]
    %v134 = vld [vmem:[#allocation3 + $0x1a0] sm:$0xf]
    %v135 = vld [vmem:[#allocation3 + $0x1a4] sm:$0xff]
    %v136 = vld [vmem:[#allocation3 + $0x1ac] sm:$0xff]
    %v137 = vld [vmem:[#allocation3 + $0x1b4] sm:$0xff]
    %v138 = vld [vmem:[#allocation3 + $0x1bc] sm:$0xf]
    %v139 = vld [vmem:[#allocation5] sm:$0xff]
    %v140 = vld [vmem:[#allocation5 + $0x8] sm:$0xff]
    %v141 = vld [vmem:[#allocation5 + $0x10] sm:$0xff]
    %v142 = vld [vmem:[#allocation5 + $0x18] sm:$0xff]
    %v143 = vld [vmem:[#allocation5 + $0x20] sm:$0xff]
    %v144 = vld [vmem:[#allocation5 + $0x28] sm:$0xff]
    %v145 = vld [vmem:[#allocation5 + $0x30] sm:$0xff]
    %v146 = vld [vmem:[#allocation5 + $0x38] sm:$0xff]
    %v147 = vld [vmem:[#allocation5 + $0x40] sm:$0xff]
    %v148 = vld [vmem:[#allocation5 + $0x48] sm:$0xff]
    %v149 = vld [vmem:[#allocation5 + $0x50] sm:$0xff]
    %v150 = vld [vmem:[#allocation5 + $0x58] sm:$0xff]
    %v151 = vld [vmem:[#allocation5 + $0x60] sm:$0xff]
    %v152 = vld [vmem:[#allocation5 + $0x68] sm:$0xff]
    %v153 = vld [vmem:[#allocation5 + $0x70] sm:$0xff]
    %v154 = vld [vmem:[#allocation5 + $0x78] sm:$0xff]
    %v155 = vld [vmem:[#allocation5 + $0x80] sm:$0xff]
    %v156 = vld [vmem:[#allocation5 + $0x88] sm:$0xff]
    %v157 = vld [vmem:[#allocation5 + $0x90] sm:$0xff]
    %v158 = vld [vmem:[#allocation5 + $0x98] sm:$0xff]
    %v159 = vld [vmem:[#allocation5 + $0xa0] sm:$0xff]
    %v160 = vld [vmem:[#allocation5 + $0xa8] sm:$0xff]
    %v161 = vld [vmem:[#allocation5 + $0xb0] sm:$0xff]
    %v162 = vld [vmem:[#allocation5 + $0xb8] sm:$0xff]
    %v163 = vld [vmem:[#allocation5 + $0xc0] sm:$0xff]
    %v164 = vld [vmem:[#allocation5 + $0xc8] sm:$0xff]
    %v165 = vld [vmem:[#allocation5 + $0xd0] sm:$0xff]
    %v166 = vld [vmem:[#allocation5 + $0xd8] sm:$0xff]
    %v167 = vld [vmem:[#allocation5 + $0xe0] sm:$0xff]
    %v168 = vld [vmem:[#allocation5 + $0xe8] sm:$0xff]
    %v169 = vld [vmem:[#allocation5 + $0xf0] sm:$0xff]
    %v170 = vld [vmem:[#allocation5 + $0xf8] sm:$0xff]
    %v171 = vld [vmem:[#allocation5 + $0x100] sm:$0xff]
    %v172 = vld [vmem:[#allocation5 + $0x108] sm:$0xff]
    %v173 = vld [vmem:[#allocation5 + $0x110] sm:$0xff]
    %v174 = vld [vmem:[#allocation5 + $0x118] sm:$0xff]
    %v175 = vld [vmem:[#allocation5 + $0x120] sm:$0xff]
    %v176 = vld [vmem:[#allocation5 + $0x128] sm:$0xff]
    %v177 = vld [vmem:[#allocation5 + $0x130] sm:$0xff]
    %v178 = vld [vmem:[#allocation5 + $0x138] sm:$0xff]
    %v179 = vld [vmem:[#allocation5 + $0x140] sm:$0xff]
    %v180 = vld [vmem:[#allocation5 + $0x148] sm:$0xff]
    %v181 = vld [vmem:[#allocation5 + $0x150] sm:$0xff]
    %v182 = vld [vmem:[#allocation5 + $0x158] sm:$0xff]
    %v183 = vld [vmem:[#allocation5 + $0x160] sm:$0xff]
    %v184 = vld [vmem:[#allocation5 + $0x168] sm:$0xff]
    %v185 = vld [vmem:[#allocation5 + $0x170] sm:$0xff]
    %v186 = vld [vmem:[#allocation5 + $0x178] sm:$0xff]
    %v187 = vld [vmem:[#allocation5 + $0x180] sm:$0xff]
    %v188 = vld [vmem:[#allocation5 + $0x188] sm:$0xff]
    %v189 = vld [vmem:[#allocation5 + $0x190] sm:$0xff]
    %v190 = vld [vmem:[#allocation5 + $0x198] sm:$0xff]
    %v191 = vld [vmem:[#allocation5 + $0x1a0] sm:$0xff]
    %v192 = vld [vmem:[#allocation5 + $0x1a8] sm:$0xff]
    %v193 = vld [vmem:[#allocation5 + $0x1b0] sm:$0xff]
    %v194 = vld [vmem:[#allocation5 + $0x1b8] sm:$0xff]
    %v195 = vld [vmem:[#allocation5 + $0x1c0] sm:$0xff]
    %v196 = vld [vmem:[#allocation5 + $0x1c8] sm:$0xff]
    %v197 = vld [vmem:[#allocation5 + $0x1d0] sm:$0xff]
    %v198 = vld [vmem:[#allocation5 + $0x1d8] sm:$0xff]
    %v199 = vld [vmem:[#allocation5 + $0x1e0] sm:$0xff]
    %v200 = vld [vmem:[#allocation5 + $0x1e8] sm:$0xff]
    %v201 = vld [vmem:[#allocation5 + $0x1f0] sm:$0xff]
    %v202 = vld [vmem:[#allocation5 + $0x1f8] sm:$0xff]
    %v203 = vld [vmem:[#allocation5 + $0x200] sm:$0xff]
    %v204 = vld [vmem:[#allocation5 + $0x208] sm:$0xff]
    %v205 = vld [vmem:[#allocation5 + $0x210] sm:$0xff]
    %v206 = vld [vmem:[#allocation5 + $0x218] sm:$0xff]
    %v207 = vld [vmem:[#allocation5 + $0x220] sm:$0xff]
    %v208 = vld [vmem:[#allocation5 + $0x228] sm:$0xff]
    %v209 = vld [vmem:[#allocation5 + $0x230] sm:$0xff]
    %v210 = vld [vmem:[#allocation5 + $0x238] sm:$0xff]
    %v211 = vld [vmem:[#allocation5 + $0x240] sm:$0xff]
    %v212 = vld [vmem:[#allocation5 + $0x248] sm:$0xff]
    %v213 = vld [vmem:[#allocation5 + $0x250] sm:$0xff]
    %v214 = vld [vmem:[#allocation5 + $0x258] sm:$0xff]
    %v215 = vld [vmem:[#allocation5 + $0x260] sm:$0xff]
    %v216 = vld [vmem:[#allocation5 + $0x268] sm:$0xff]
    %v217 = vld [vmem:[#allocation5 + $0x270] sm:$0xff]
    %v218 = vld [vmem:[#allocation5 + $0x278] sm:$0xff]
    %v219 = vld [vmem:[#allocation5 + $0x280] sm:$0xff]
    %v220 = vld [vmem:[#allocation5 + $0x288] sm:$0xff]
    %v221 = vld [vmem:[#allocation5 + $0x290] sm:$0xff]
    %v222 = vld [vmem:[#allocation5 + $0x298] sm:$0xff]
    %v223 = vld [vmem:[#allocation5 + $0x2a0] sm:$0xff]
    %v224 = vld [vmem:[#allocation5 + $0x2a8] sm:$0xff]
    %v225 = vld [vmem:[#allocation5 + $0x2b0] sm:$0xff]
    %v226 = vld [vmem:[#allocation5 + $0x2b8] sm:$0xff]
    %v227 = vld [vmem:[#allocation5 + $0x2c0] sm:$0xff]
    %v228 = vld [vmem:[#allocation5 + $0x2c8] sm:$0xff]
    %v229 = vld [vmem:[#allocation5 + $0x2d0] sm:$0xff]
    %v230 = vld [vmem:[#allocation5 + $0x2d8] sm:$0xff]
    %v231 = vld [vmem:[#allocation5 + $0x2e0] sm:$0xff]
    %v232 = vld [vmem:[#allocation5 + $0x2e8] sm:$0xff]
    %v233 = vld [vmem:[#allocation5 + $0x2f0] sm:$0xff]
    %v234 = vld [vmem:[#allocation5 + $0x2f8] sm:$0xff]
    %v235 = vld [vmem:[#allocation5 + $0x300] sm:$0xff]
    %v236 = vld [vmem:[#allocation5 + $0x308] sm:$0xff]
    %v237 = vld [vmem:[#allocation5 + $0x310] sm:$0xff]
    %v238 = vld [vmem:[#allocation5 + $0x318] sm:$0xff]
    %v239 = vld [vmem:[#allocation5 + $0x320] sm:$0xff]
    %v240 = vld [vmem:[#allocation5 + $0x328] sm:$0xff]
    %v241 = vld [vmem:[#allocation5 + $0x330] sm:$0xff]
    %v242 = vld [vmem:[#allocation5 + $0x338] sm:$0xff]
    %v243 = vld [vmem:[#allocation5 + $0x340] sm:$0xff]
    %v244 = vld [vmem:[#allocation5 + $0x348] sm:$0xff]
    %v245 = vld [vmem:[#allocation5 + $0x350] sm:$0xff]
    %v246 = vld [vmem:[#allocation5 + $0x358] sm:$0xff]
    %v247 = vld [vmem:[#allocation5 + $0x360] sm:$0xff]
    %v248 = vld [vmem:[#allocation5 + $0x368] sm:$0xff]
    %v249 = vld [vmem:[#allocation5 + $0x370] sm:$0xff]
    %v250 = vld [vmem:[#allocation5 + $0x378] sm:$0xff]
    %v251 = vld [vmem:[%s2] sm:$0x3]
    %v253 = vperm.slane %v251, 0
    %v254 = vperm.slane %v251, 1
    %v321 = vunpack.c.l.b16 %v75
    %v322 = vunpack.c.h.b16 %v75
    %v323 = vunpack.c.l.b16 %v76
    %v324 = vunpack.c.h.b16 %v76
    %v325 = vunpack.c.l.b16 %v77
    %v326 = vunpack.c.h.b16 %v77
    %v327 = vunpack.c.l.b16 %v78
    %v328 = vunpack.c.l.b16 %v79
    %v329 = vunpack.c.h.b16 %v79
    %v330 = vunpack.c.l.b16 %v80
    %v331 = vunpack.c.h.b16 %v80
    %v332 = vunpack.c.l.b16 %v81
    %v333 = vunpack.c.h.b16 %v81
    %v334 = vunpack.c.l.b16 %v82
    %v335 = vunpack.c.l.b16 %v83
    %v336 = vunpack.c.h.b16 %v83
    %v337 = vunpack.c.l.b16 %v84
    %v338 = vunpack.c.h.b16 %v84
    %v339 = vunpack.c.l.b16 %v85
    %v340 = vunpack.c.h.b16 %v85
    %v341 = vunpack.c.l.b16 %v86
    %v342 = vunpack.c.l.b16 %v87
    %v343 = vunpack.c.h.b16 %v87
    %v344 = vunpack.c.l.b16 %v88
    %v345 = vunpack.c.h.b16 %v88
    %v346 = vunpack.c.l.b16 %v89
    %v347 = vunpack.c.h.b16 %v89
    %v348 = vunpack.c.l.b16 %v90
    %v349 = vunpack.c.l.b16 %v91
    %v350 = vunpack.c.h.b16 %v91
    %v351 = vunpack.c.l.b16 %v92
    %v352 = vunpack.c.h.b16 %v92
    %v353 = vunpack.c.l.b16 %v93
    %v354 = vunpack.c.h.b16 %v93
    %v355 = vunpack.c.l.b16 %v94
    %v356 = vunpack.c.l.b16 %v95
    %v357 = vunpack.c.h.b16 %v95
    %v358 = vunpack.c.l.b16 %v96
    %v359 = vunpack.c.h.b16 %v96
    %v360 = vunpack.c.l.b16 %v97
    %v361 = vunpack.c.h.b16 %v97
    %v362 = vunpack.c.l.b16 %v98
    %v363 = vunpack.c.l.b16 %v99
    %v364 = vunpack.c.h.b16 %v99
    %v365 = vunpack.c.l.b16 %v100
    %v366 = vunpack.c.h.b16 %v100
    %v367 = vunpack.c.l.b16 %v101
    %v368 = vunpack.c.h.b16 %v101
    %v369 = vunpack.c.l.b16 %v102
    %v370 = vunpack.c.l.b16 %v103
    %v371 = vunpack.c.h.b16 %v103
    %v372 = vunpack.c.l.b16 %v104
    %v373 = vunpack.c.h.b16 %v104
    %v374 = vunpack.c.l.b16 %v105
    %v375 = vunpack.c.h.b16 %v105
    %v376 = vunpack.c.l.b16 %v106
    %v377 = vunpack.c.l.b16 %v107
    %v378 = vunpack.c.h.b16 %v107
    %v379 = vunpack.c.l.b16 %v108
    %v380 = vunpack.c.h.b16 %v108
    %v381 = vunpack.c.l.b16 %v109
    %v382 = vunpack.c.h.b16 %v109
    %v383 = vunpack.c.l.b16 %v110
    %v384 = vunpack.c.l.b16 %v111
    %v385 = vunpack.c.h.b16 %v111
    %v386 = vunpack.c.l.b16 %v112
    %v387 = vunpack.c.h.b16 %v112
    %v388 = vunpack.c.l.b16 %v113
    %v389 = vunpack.c.h.b16 %v113
    %v390 = vunpack.c.l.b16 %v114
    %v391 = vunpack.c.l.b16 %v115
    %v392 = vunpack.c.h.b16 %v115
    %v393 = vunpack.c.l.b16 %v116
    %v394 = vunpack.c.h.b16 %v116
    %v395 = vunpack.c.l.b16 %v117
    %v396 = vunpack.c.h.b16 %v117
    %v397 = vunpack.c.l.b16 %v118
    %v398 = vunpack.c.l.b16 %v119
    %v399 = vunpack.c.h.b16 %v119
    %v400 = vunpack.c.l.b16 %v120
    %v401 = vunpack.c.h.b16 %v120
    %v402 = vunpack.c.l.b16 %v121
    %v403 = vunpack.c.h.b16 %v121
    %v404 = vunpack.c.l.b16 %v122
    %v405 = vunpack.c.l.b16 %v123
    %v406 = vunpack.c.h.b16 %v123
    %v407 = vunpack.c.l.b16 %v124
    %v408 = vunpack.c.h.b16 %v124
    %v409 = vunpack.c.l.b16 %v125
    %v410 = vunpack.c.h.b16 %v125
    %v411 = vunpack.c.l.b16 %v126
    %v412 = vunpack.c.l.b16 %v127
    %v413 = vunpack.c.h.b16 %v127
    %v414 = vunpack.c.l.b16 %v128
    %v415 = vunpack.c.h.b16 %v128
    %v416 = vunpack.c.l.b16 %v129
    %v417 = vunpack.c.h.b16 %v129
    %v418 = vunpack.c.l.b16 %v130
    %v419 = vunpack.c.l.b16 %v131
    %v420 = vunpack.c.h.b16 %v131
    %v421 = vunpack.c.l.b16 %v132
    %v422 = vunpack.c.h.b16 %v132
    %v423 = vunpack.c.l.b16 %v133
    %v424 = vunpack.c.h.b16 %v133
    %v425 = vunpack.c.l.b16 %v134
    %v426 = vunpack.c.l.b16 %v135
    %v427 = vunpack.c.h.b16 %v135
    %v428 = vunpack.c.l.b16 %v136
    %v429 = vunpack.c.h.b16 %v136
    %v430 = vunpack.c.l.b16 %v137
    %v431 = vunpack.c.h.b16 %v137
    %v432 = vunpack.c.l.b16 %v138
    %v433 = vpack.c.b16 %v328, %v321
    %v434 = vpack.c.b16 %v329, %v322
    %v435 = vpack.c.b16 %v330, %v323
    %v436 = vpack.c.b16 %v331, %v324
    %v437 = vpack.c.b16 %v332, %v325
    %v438 = vpack.c.b16 %v333, %v326
    %v439 = vpack.c.b16 %v334, %v327
    %v440 = vpack.c.b16 %v342, %v335
    %v441 = vpack.c.b16 %v343, %v336
    %v442 = vpack.c.b16 %v344, %v337
    %v443 = vpack.c.b16 %v345, %v338
    %v444 = vpack.c.b16 %v346, %v339
    %v445 = vpack.c.b16 %v347, %v340
    %v446 = vpack.c.b16 %v348, %v341
    %v447 = vpack.c.b16 %v356, %v349
    %v448 = vpack.c.b16 %v357, %v350
    %v449 = vpack.c.b16 %v358, %v351
    %v450 = vpack.c.b16 %v359, %v352
    %v451 = vpack.c.b16 %v360, %v353
    %v452 = vpack.c.b16 %v361, %v354
    %v453 = vpack.c.b16 %v362, %v355
    %v454 = vpack.c.b16 %v370, %v363
    %v455 = vpack.c.b16 %v371, %v364
    %v456 = vpack.c.b16 %v372, %v365
    %v457 = vpack.c.b16 %v373, %v366
    %v458 = vpack.c.b16 %v374, %v367
    %v459 = vpack.c.b16 %v375, %v368
    %v460 = vpack.c.b16 %v376, %v369
    %v461 = vpack.c.b16 %v384, %v377
    %v462 = vpack.c.b16 %v385, %v378
    %v463 = vpack.c.b16 %v386, %v379
    %v464 = vpack.c.b16 %v387, %v380
    %v465 = vpack.c.b16 %v388, %v381
    %v466 = vpack.c.b16 %v389, %v382
    %v467 = vpack.c.b16 %v390, %v383
    %v468 = vpack.c.b16 %v398, %v391
    %v469 = vpack.c.b16 %v399, %v392
    %v470 = vpack.c.b16 %v400, %v393
    %v471 = vpack.c.b16 %v401, %v394
    %v472 = vpack.c.b16 %v402, %v395
    %v473 = vpack.c.b16 %v403, %v396
    %v474 = vpack.c.b16 %v404, %v397
    %v475 = vpack.c.b16 %v412, %v405
    %v476 = vpack.c.b16 %v413, %v406
    %v477 = vpack.c.b16 %v414, %v407
    %v478 = vpack.c.b16 %v415, %v408
    %v479 = vpack.c.b16 %v416, %v409
    %v480 = vpack.c.b16 %v417, %v410
    %v481 = vpack.c.b16 %v418, %v411
    %v482 = vpack.c.b16 %v426, %v419
    %v483 = vpack.c.b16 %v427, %v420
    %v484 = vpack.c.b16 %v428, %v421
    %v485 = vpack.c.b16 %v429, %v422
    %v486 = vpack.c.b16 %v430, %v423
    %v487 = vpack.c.b16 %v431, %v424
    %v488 = vpack.c.b16 %v432, %v425
    %v657 = vunpack.c.l.b16 %v139
    %v658 = vunpack.c.h.b16 %v139
    %v659 = vunpack.c.l.b16 %v140
    %v660 = vunpack.c.h.b16 %v140
    %v661 = vunpack.c.l.b16 %v141
    %v662 = vunpack.c.h.b16 %v141
    %v663 = vunpack.c.l.b16 %v142
    %v664 = vunpack.c.h.b16 %v142
    %v665 = vunpack.c.l.b16 %v143
    %v666 = vunpack.c.h.b16 %v143
    %v667 = vunpack.c.l.b16 %v144
    %v668 = vunpack.c.h.b16 %v144
    %v669 = vunpack.c.l.b16 %v145
    %v670 = vunpack.c.h.b16 %v145
    %v671 = vunpack.c.l.b16 %v146
    %v672 = vunpack.c.h.b16 %v146
    %v673 = vunpack.c.l.b16 %v147
    %v674 = vunpack.c.h.b16 %v147
    %v675 = vunpack.c.l.b16 %v148
    %v676 = vunpack.c.h.b16 %v148
    %v677 = vunpack.c.l.b16 %v149
    %v678 = vunpack.c.h.b16 %v149
    %v679 = vunpack.c.l.b16 %v150
    %v680 = vunpack.c.h.b16 %v150
    %v681 = vunpack.c.l.b16 %v151
    %v682 = vunpack.c.h.b16 %v151
    %v683 = vunpack.c.l.b16 %v152
    %v684 = vunpack.c.h.b16 %v152
    %v685 = vunpack.c.l.b16 %v153
    %v686 = vunpack.c.h.b16 %v153
    %v687 = vunpack.c.l.b16 %v154
    %v688 = vunpack.c.h.b16 %v154
    %v689 = vunpack.c.l.b16 %v155
    %v690 = vunpack.c.h.b16 %v155
    %v691 = vunpack.c.l.b16 %v156
    %v692 = vunpack.c.h.b16 %v156
    %v693 = vunpack.c.l.b16 %v157
    %v694 = vunpack.c.h.b16 %v157
    %v695 = vunpack.c.l.b16 %v158
    %v696 = vunpack.c.h.b16 %v158
    %v697 = vunpack.c.l.b16 %v159
    %v698 = vunpack.c.h.b16 %v159
    %v699 = vunpack.c.l.b16 %v160
    %v700 = vunpack.c.h.b16 %v160
    %v701 = vunpack.c.l.b16 %v161
    %v702 = vunpack.c.h.b16 %v161
    %v703 = vunpack.c.l.b16 %v162
    %v704 = vunpack.c.h.b16 %v162
    %v705 = vunpack.c.l.b16 %v163
    %v706 = vunpack.c.h.b16 %v163
    %v707 = vunpack.c.l.b16 %v164
    %v708 = vunpack.c.h.b16 %v164
    %v709 = vunpack.c.l.b16 %v165
    %v710 = vunpack.c.h.b16 %v165
    %v711 = vunpack.c.l.b16 %v166
    %v712 = vunpack.c.h.b16 %v166
    %v713 = vunpack.c.l.b16 %v167
    %v714 = vunpack.c.h.b16 %v167
    %v715 = vunpack.c.l.b16 %v168
    %v716 = vunpack.c.h.b16 %v168
    %v717 = vunpack.c.l.b16 %v169
    %v718 = vunpack.c.h.b16 %v169
    %v719 = vunpack.c.l.b16 %v170
    %v720 = vunpack.c.h.b16 %v170
    %v721 = vunpack.c.l.b16 %v171
    %v722 = vunpack.c.h.b16 %v171
    %v723 = vunpack.c.l.b16 %v172
    %v724 = vunpack.c.h.b16 %v172
    %v725 = vunpack.c.l.b16 %v173
    %v726 = vunpack.c.h.b16 %v173
    %v727 = vunpack.c.l.b16 %v174
    %v728 = vunpack.c.h.b16 %v174
    %v729 = vunpack.c.l.b16 %v175
    %v730 = vunpack.c.h.b16 %v175
    %v731 = vunpack.c.l.b16 %v176
    %v732 = vunpack.c.h.b16 %v176
    %v733 = vunpack.c.l.b16 %v177
    %v734 = vunpack.c.h.b16 %v177
    %v735 = vunpack.c.l.b16 %v178
    %v736 = vunpack.c.h.b16 %v178
    %v737 = vunpack.c.l.b16 %v179
    %v738 = vunpack.c.h.b16 %v179
    %v739 = vunpack.c.l.b16 %v180
    %v740 = vunpack.c.h.b16 %v180
    %v741 = vunpack.c.l.b16 %v181
    %v742 = vunpack.c.h.b16 %v181
    %v743 = vunpack.c.l.b16 %v182
    %v744 = vunpack.c.h.b16 %v182
    %v745 = vunpack.c.l.b16 %v183
    %v746 = vunpack.c.h.b16 %v183
    %v747 = vunpack.c.l.b16 %v184
    %v748 = vunpack.c.h.b16 %v184
    %v749 = vunpack.c.l.b16 %v185
    %v750 = vunpack.c.h.b16 %v185
    %v751 = vunpack.c.l.b16 %v186
    %v752 = vunpack.c.h.b16 %v186
    %v753 = vunpack.c.l.b16 %v187
    %v754 = vunpack.c.h.b16 %v187
    %v755 = vunpack.c.l.b16 %v188
    %v756 = vunpack.c.h.b16 %v188
    %v757 = vunpack.c.l.b16 %v189
    %v758 = vunpack.c.h.b16 %v189
    %v759 = vunpack.c.l.b16 %v190
    %v760 = vunpack.c.h.b16 %v190
    %v761 = vunpack.c.l.b16 %v191
    %v762 = vunpack.c.h.b16 %v191
    %v763 = vunpack.c.l.b16 %v192
    %v764 = vunpack.c.h.b16 %v192
    %v765 = vunpack.c.l.b16 %v193
    %v766 = vunpack.c.h.b16 %v193
    %v767 = vunpack.c.l.b16 %v194
    %v768 = vunpack.c.h.b16 %v194
    %v769 = vunpack.c.l.b16 %v195
    %v770 = vunpack.c.h.b16 %v195
    %v771 = vunpack.c.l.b16 %v196
    %v772 = vunpack.c.h.b16 %v196
    %v773 = vunpack.c.l.b16 %v197
    %v774 = vunpack.c.h.b16 %v197
    %v775 = vunpack.c.l.b16 %v198
    %v776 = vunpack.c.h.b16 %v198
    %v777 = vunpack.c.l.b16 %v199
    %v778 = vunpack.c.h.b16 %v199
    %v779 = vunpack.c.l.b16 %v200
    %v780 = vunpack.c.h.b16 %v200
    %v781 = vunpack.c.l.b16 %v201
    %v782 = vunpack.c.h.b16 %v201
    %v783 = vunpack.c.l.b16 %v202
    %v784 = vunpack.c.h.b16 %v202
    %v785 = vunpack.c.l.b16 %v203
    %v786 = vunpack.c.h.b16 %v203
    %v787 = vunpack.c.l.b16 %v204
    %v788 = vunpack.c.h.b16 %v204
    %v789 = vunpack.c.l.b16 %v205
    %v790 = vunpack.c.h.b16 %v205
    %v791 = vunpack.c.l.b16 %v206
    %v792 = vunpack.c.h.b16 %v206
    %v793 = vunpack.c.l.b16 %v207
    %v794 = vunpack.c.h.b16 %v207
    %v795 = vunpack.c.l.b16 %v208
    %v796 = vunpack.c.h.b16 %v208
    %v797 = vunpack.c.l.b16 %v209
    %v798 = vunpack.c.h.b16 %v209
    %v799 = vunpack.c.l.b16 %v210
    %v800 = vunpack.c.h.b16 %v210
    %v801 = vunpack.c.l.b16 %v211
    %v802 = vunpack.c.h.b16 %v211
    %v803 = vunpack.c.l.b16 %v212
    %v804 = vunpack.c.h.b16 %v212
    %v805 = vunpack.c.l.b16 %v213
    %v806 = vunpack.c.h.b16 %v213
    %v807 = vunpack.c.l.b16 %v214
    %v808 = vunpack.c.h.b16 %v214
    %v809 = vunpack.c.l.b16 %v215
    %v810 = vunpack.c.h.b16 %v215
    %v811 = vunpack.c.l.b16 %v216
    %v812 = vunpack.c.h.b16 %v216
    %v813 = vunpack.c.l.b16 %v217
    %v814 = vunpack.c.h.b16 %v217
    %v815 = vunpack.c.l.b16 %v218
    %v816 = vunpack.c.h.b16 %v218
    %v817 = vunpack.c.l.b16 %v219
    %v818 = vunpack.c.h.b16 %v219
    %v819 = vunpack.c.l.b16 %v220
    %v820 = vunpack.c.h.b16 %v220
    %v821 = vunpack.c.l.b16 %v221
    %v822 = vunpack.c.h.b16 %v221
    %v823 = vunpack.c.l.b16 %v222
    %v824 = vunpack.c.h.b16 %v222
    %v825 = vunpack.c.l.b16 %v223
    %v826 = vunpack.c.h.b16 %v223
    %v827 = vunpack.c.l.b16 %v224
    %v828 = vunpack.c.h.b16 %v224
    %v829 = vunpack.c.l.b16 %v225
    %v830 = vunpack.c.h.b16 %v225
    %v831 = vunpack.c.l.b16 %v226
    %v832 = vunpack.c.h.b16 %v226
    %v833 = vunpack.c.l.b16 %v227
    %v834 = vunpack.c.h.b16 %v227
    %v835 = vunpack.c.l.b16 %v228
    %v836 = vunpack.c.h.b16 %v228
    %v837 = vunpack.c.l.b16 %v229
    %v838 = vunpack.c.h.b16 %v229
    %v839 = vunpack.c.l.b16 %v230
    %v840 = vunpack.c.h.b16 %v230
    %v841 = vunpack.c.l.b16 %v231
    %v842 = vunpack.c.h.b16 %v231
    %v843 = vunpack.c.l.b16 %v232
    %v844 = vunpack.c.h.b16 %v232
    %v845 = vunpack.c.l.b16 %v233
    %v846 = vunpack.c.h.b16 %v233
    %v847 = vunpack.c.l.b16 %v234
    %v848 = vunpack.c.h.b16 %v234
    %v849 = vunpack.c.l.b16 %v235
    %v850 = vunpack.c.h.b16 %v235
    %v851 = vunpack.c.l.b16 %v236
    %v852 = vunpack.c.h.b16 %v236
    %v853 = vunpack.c.l.b16 %v237
    %v854 = vunpack.c.h.b16 %v237
    %v855 = vunpack.c.l.b16 %v238
    %v856 = vunpack.c.h.b16 %v238
    %v857 = vunpack.c.l.b16 %v239
    %v858 = vunpack.c.h.b16 %v239
    %v859 = vunpack.c.l.b16 %v240
    %v860 = vunpack.c.h.b16 %v240
    %v861 = vunpack.c.l.b16 %v241
    %v862 = vunpack.c.h.b16 %v241
    %v863 = vunpack.c.l.b16 %v242
    %v864 = vunpack.c.h.b16 %v242
    %v865 = vunpack.c.l.b16 %v243
    %v866 = vunpack.c.h.b16 %v243
    %v867 = vunpack.c.l.b16 %v244
    %v868 = vunpack.c.h.b16 %v244
    %v869 = vunpack.c.l.b16 %v245
    %v870 = vunpack.c.h.b16 %v245
    %v871 = vunpack.c.l.b16 %v246
    %v872 = vunpack.c.h.b16 %v246
    %v873 = vunpack.c.l.b16 %v247
    %v874 = vunpack.c.h.b16 %v247
    %v875 = vunpack.c.l.b16 %v248
    %v876 = vunpack.c.h.b16 %v248
    %v877 = vunpack.c.l.b16 %v249
    %v878 = vunpack.c.h.b16 %v249
    %v879 = vunpack.c.l.b16 %v250
    %v880 = vunpack.c.h.b16 %v250
    %v881 = vpack.c.b16 %v659, %v657
    %v882 = vpack.c.b16 %v660, %v658
    %v883 = vpack.c.b16 %v663, %v661
    %v884 = vpack.c.b16 %v664, %v662
    %v885 = vpack.c.b16 %v667, %v665
    %v886 = vpack.c.b16 %v668, %v666
    %v887 = vpack.c.b16 %v671, %v669
    %v888 = vpack.c.b16 %v672, %v670
    %v889 = vpack.c.b16 %v675, %v673
    %v890 = vpack.c.b16 %v676, %v674
    %v891 = vpack.c.b16 %v679, %v677
    %v892 = vpack.c.b16 %v680, %v678
    %v893 = vpack.c.b16 %v683, %v681
    %v894 = vpack.c.b16 %v684, %v682
    %v895 = vpack.c.b16 %v687, %v685
    %v896 = vpack.c.b16 %v688, %v686
    %v897 = vpack.c.b16 %v691, %v689
    %v898 = vpack.c.b16 %v692, %v690
    %v899 = vpack.c.b16 %v695, %v693
    %v900 = vpack.c.b16 %v696, %v694
    %v901 = vpack.c.b16 %v699, %v697
    %v902 = vpack.c.b16 %v700, %v698
    %v903 = vpack.c.b16 %v703, %v701
    %v904 = vpack.c.b16 %v704, %v702
    %v905 = vpack.c.b16 %v707, %v705
    %v906 = vpack.c.b16 %v708, %v706
    %v907 = vpack.c.b16 %v711, %v709
    %v908 = vpack.c.b16 %v712, %v710
    %v909 = vpack.c.b16 %v715, %v713
    %v910 = vpack.c.b16 %v716, %v714
    %v911 = vpack.c.b16 %v719, %v717
    %v912 = vpack.c.b16 %v720, %v718
    %v913 = vpack.c.b16 %v723, %v721
    %v914 = vpack.c.b16 %v724, %v722
    %v915 = vpack.c.b16 %v727, %v725
    %v916 = vpack.c.b16 %v728, %v726
    %v917 = vpack.c.b16 %v731, %v729
    %v918 = vpack.c.b16 %v732, %v730
    %v919 = vpack.c.b16 %v735, %v733
    %v920 = vpack.c.b16 %v736, %v734
    %v921 = vpack.c.b16 %v739, %v737
    %v922 = vpack.c.b16 %v740, %v738
    %v923 = vpack.c.b16 %v743, %v741
    %v924 = vpack.c.b16 %v744, %v742
    %v925 = vpack.c.b16 %v747, %v745
    %v926 = vpack.c.b16 %v748, %v746
    %v927 = vpack.c.b16 %v751, %v749
    %v928 = vpack.c.b16 %v752, %v750
    %v929 = vpack.c.b16 %v755, %v753
    %v930 = vpack.c.b16 %v756, %v754
    %v931 = vpack.c.b16 %v759, %v757
    %v932 = vpack.c.b16 %v760, %v758
    %v933 = vpack.c.b16 %v763, %v761
    %v934 = vpack.c.b16 %v764, %v762
    %v935 = vpack.c.b16 %v767, %v765
    %v936 = vpack.c.b16 %v768, %v766
    %v937 = vpack.c.b16 %v771, %v769
    %v938 = vpack.c.b16 %v772, %v770
    %v939 = vpack.c.b16 %v775, %v773
    %v940 = vpack.c.b16 %v776, %v774
    %v941 = vpack.c.b16 %v779, %v777
    %v942 = vpack.c.b16 %v780, %v778
    %v943 = vpack.c.b16 %v783, %v781
    %v944 = vpack.c.b16 %v784, %v782
    %v945 = vpack.c.b16 %v787, %v785
    %v946 = vpack.c.b16 %v788, %v786
    %v947 = vpack.c.b16 %v791, %v789
    %v948 = vpack.c.b16 %v792, %v790
    %v949 = vpack.c.b16 %v795, %v793
    %v950 = vpack.c.b16 %v796, %v794
    %v951 = vpack.c.b16 %v799, %v797
    %v952 = vpack.c.b16 %v800, %v798
    %v953 = vpack.c.b16 %v803, %v801
    %v954 = vpack.c.b16 %v804, %v802
    %v955 = vpack.c.b16 %v807, %v805
    %v956 = vpack.c.b16 %v808, %v806
    %v957 = vpack.c.b16 %v811, %v809
    %v958 = vpack.c.b16 %v812, %v810
    %v959 = vpack.c.b16 %v815, %v813
    %v960 = vpack.c.b16 %v816, %v814
    %v961 = vpack.c.b16 %v819, %v817
    %v962 = vpack.c.b16 %v820, %v818
    %v963 = vpack.c.b16 %v823, %v821
    %v964 = vpack.c.b16 %v824, %v822
    %v965 = vpack.c.b16 %v827, %v825
    %v966 = vpack.c.b16 %v828, %v826
    %v967 = vpack.c.b16 %v831, %v829
    %v968 = vpack.c.b16 %v832, %v830
    %v969 = vpack.c.b16 %v835, %v833
    %v970 = vpack.c.b16 %v836, %v834
    %v971 = vpack.c.b16 %v839, %v837
    %v972 = vpack.c.b16 %v840, %v838
    %v973 = vpack.c.b16 %v843, %v841
    %v974 = vpack.c.b16 %v844, %v842
    %v975 = vpack.c.b16 %v847, %v845
    %v976 = vpack.c.b16 %v848, %v846
    %v977 = vpack.c.b16 %v851, %v849
    %v978 = vpack.c.b16 %v852, %v850
    %v979 = vpack.c.b16 %v855, %v853
    %v980 = vpack.c.b16 %v856, %v854
    %v981 = vpack.c.b16 %v859, %v857
    %v982 = vpack.c.b16 %v860, %v858
    %v983 = vpack.c.b16 %v863, %v861
    %v984 = vpack.c.b16 %v864, %v862
    %v985 = vpack.c.b16 %v867, %v865
    %v986 = vpack.c.b16 %v868, %v866
    %v987 = vpack.c.b16 %v871, %v869
    %v988 = vpack.c.b16 %v872, %v870
    %v989 = vpack.c.b16 %v875, %v873
    %v990 = vpack.c.b16 %v876, %v874
    %v991 = vpack.c.b16 %v879, %v877
    %v992 = vpack.c.b16 %v880, %v878
    %1105 = vmatpush.bf16.msra.mxu0 %v895
    %1106 = vmatpush.bf16.msra.mxu0 %v893
    %1107 = vmatpush.bf16.msra.mxu0 %v891
    %1108 = vmatpush.bf16.msra.mxu0 %v889
    %1109 = vmatpush.bf16.msra.mxu0 %v887
    %1110 = vmatpush.bf16.msra.mxu0 %v885
    %1111 = vmatpush.bf16.msra.mxu0 %v883
    %1112 = vmatpush.bf16.msra.mxu0 %v881
    %1113 = vmatmul.bf16.gmra.mxu0 %v433
    %v1114 = vpop.f32.mrf.mxu0
    %v1115 = vadd.f32 %v253, %v1114
    %v1116 = vpop.f32.mrf.mxu0
    %v1117 = vadd.f32 %v253, %v1116
    %1118 = vmatmul.bf16.gmra.mxu0 %v440
    %v1119 = vpop.f32.mrf.mxu0
    %v1120 = vadd.f32 %v253, %v1119
    %v1121 = vpop.f32.mrf.mxu0
    %v1122 = vadd.f32 %v253, %v1121
    %1123 = vmatmul.bf16.gmra.mxu0 %v447
    %v1124 = vpop.f32.mrf.mxu0
    %v1125 = vadd.f32 %v253, %v1124
    %v1126 = vpop.f32.mrf.mxu0
    %v1127 = vadd.f32 %v253, %v1126
    %1128 = vmatmul.bf16.gmra.mxu0 %v454
    %v1129 = vpop.f32.mrf.mxu0
    %v1130 = vadd.f32 %v253, %v1129
    %v1131 = vpop.f32.mrf.mxu0
    %v1132 = vadd.f32 %v253, %v1131
    %1133 = vmatmul.bf16.gmra.mxu0 %v461
    %v1134 = vpop.f32.mrf.mxu0
    %v1135 = vadd.f32 %v253, %v1134
    %v1136 = vpop.f32.mrf.mxu0
    %v1137 = vadd.f32 %v253, %v1136
    %1138 = vmatmul.bf16.gmra.mxu0 %v468
    %v1139 = vpop.f32.mrf.mxu0
    %v1140 = vadd.f32 %v253, %v1139
    %v1141 = vpop.f32.mrf.mxu0
    %v1142 = vadd.f32 %v253, %v1141
    %1143 = vmatmul.bf16.gmra.mxu0 %v475
    %v1144 = vpop.f32.mrf.mxu0
    %v1145 = vadd.f32 %v253, %v1144
    %v1146 = vpop.f32.mrf.mxu0
    %v1147 = vadd.f32 %v253, %v1146
    %1148 = vmatmul.bf16.gmra.mxu0 %v482
    %v1149 = vpop.f32.mrf.mxu0
    %v1150 = vadd.f32 %v253, %v1149
    %v1151 = vpop.f32.mrf.mxu0
    %v1152 = vadd.f32 %v253, %v1151
    %1153 = vdwg.mxu0
    %1154 = vmatpush.bf16.msra.mxu0 %v911
    %1155 = vmatpush.bf16.msra.mxu0 %v909
    %1156 = vmatpush.bf16.msra.mxu0 %v907
    %1157 = vmatpush.bf16.msra.mxu0 %v905
    %1158 = vmatpush.bf16.msra.mxu0 %v903
    %1159 = vmatpush.bf16.msra.mxu0 %v901
    %1160 = vmatpush.bf16.msra.mxu0 %v899
    %1161 = vmatpush.bf16.msra.mxu0 %v897
    %1162 = vmatmul.bf16.gmra.mxu0 %v434
    %v1163 = vpop.f32.mrf.mxu0
    %v1164 = vadd.f32 %v1115, %v1163
    %v1165 = vpop.f32.mrf.mxu0
    %v1166 = vadd.f32 %v1117, %v1165
    %1167 = vmatmul.bf16.gmra.mxu0 %v441
    %v1168 = vpop.f32.mrf.mxu0
    %v1169 = vadd.f32 %v1120, %v1168
    %v1170 = vpop.f32.mrf.mxu0
    %v1171 = vadd.f32 %v1122, %v1170
    %1172 = vmatmul.bf16.gmra.mxu0 %v448
    %v1173 = vpop.f32.mrf.mxu0
    %v1174 = vadd.f32 %v1125, %v1173
    %v1175 = vpop.f32.mrf.mxu0
    %v1176 = vadd.f32 %v1127, %v1175
    %1177 = vmatmul.bf16.gmra.mxu0 %v455
    %v1178 = vpop.f32.mrf.mxu0
    %v1179 = vadd.f32 %v1130, %v1178
    %v1180 = vpop.f32.mrf.mxu0
    %v1181 = vadd.f32 %v1132, %v1180
    %1182 = vmatmul.bf16.gmra.mxu0 %v462
    %v1183 = vpop.f32.mrf.mxu0
    %v1184 = vadd.f32 %v1135, %v1183
    %v1185 = vpop.f32.mrf.mxu0
    %v1186 = vadd.f32 %v1137, %v1185
    %1187 = vmatmul.bf16.gmra.mxu0 %v469
    %v1188 = vpop.f32.mrf.mxu0
    %v1189 = vadd.f32 %v1140, %v1188
    %v1190 = vpop.f32.mrf.mxu0
    %v1191 = vadd.f32 %v1142, %v1190
    %1192 = vmatmul.bf16.gmra.mxu0 %v476
    %v1193 = vpop.f32.mrf.mxu0
    %v1194 = vadd.f32 %v1145, %v1193
    %v1195 = vpop.f32.mrf.mxu0
    %v1196 = vadd.f32 %v1147, %v1195
    %1197 = vmatmul.bf16.gmra.mxu0 %v483
    %v1198 = vpop.f32.mrf.mxu0
    %v1199 = vadd.f32 %v1150, %v1198
    %v1200 = vpop.f32.mrf.mxu0
    %v1201 = vadd.f32 %v1152, %v1200
    %1202 = vdwg.mxu0
    %1203 = vmatpush.bf16.msra.mxu0 %v927
    %1204 = vmatpush.bf16.msra.mxu0 %v925
    %1205 = vmatpush.bf16.msra.mxu0 %v923
    %1206 = vmatpush.bf16.msra.mxu0 %v921
    %1207 = vmatpush.bf16.msra.mxu0 %v919
    %1208 = vmatpush.bf16.msra.mxu0 %v917
    %1209 = vmatpush.bf16.msra.mxu0 %v915
    %1210 = vmatpush.bf16.msra.mxu0 %v913
    %1211 = vmatmul.bf16.gmra.mxu0 %v435
    %v1212 = vpop.f32.mrf.mxu0
    %v1213 = vadd.f32 %v1164, %v1212
    %v1214 = vpop.f32.mrf.mxu0
    %v1215 = vadd.f32 %v1166, %v1214
    %1216 = vmatmul.bf16.gmra.mxu0 %v442
    %v1217 = vpop.f32.mrf.mxu0
    %v1218 = vadd.f32 %v1169, %v1217
    %v1219 = vpop.f32.mrf.mxu0
    %v1220 = vadd.f32 %v1171, %v1219
    %1221 = vmatmul.bf16.gmra.mxu0 %v449
    %v1222 = vpop.f32.mrf.mxu0
    %v1223 = vadd.f32 %v1174, %v1222
    %v1224 = vpop.f32.mrf.mxu0
    %v1225 = vadd.f32 %v1176, %v1224
    %1226 = vmatmul.bf16.gmra.mxu0 %v456
    %v1227 = vpop.f32.mrf.mxu0
    %v1228 = vadd.f32 %v1179, %v1227
    %v1229 = vpop.f32.mrf.mxu0
    %v1230 = vadd.f32 %v1181, %v1229
    %1231 = vmatmul.bf16.gmra.mxu0 %v463
    %v1232 = vpop.f32.mrf.mxu0
    %v1233 = vadd.f32 %v1184, %v1232
    %v1234 = vpop.f32.mrf.mxu0
    %v1235 = vadd.f32 %v1186, %v1234
    %1236 = vmatmul.bf16.gmra.mxu0 %v470
    %v1237 = vpop.f32.mrf.mxu0
    %v1238 = vadd.f32 %v1189, %v1237
    %v1239 = vpop.f32.mrf.mxu0
    %v1240 = vadd.f32 %v1191, %v1239
    %1241 = vmatmul.bf16.gmra.mxu0 %v477
    %v1242 = vpop.f32.mrf.mxu0
    %v1243 = vadd.f32 %v1194, %v1242
    %v1244 = vpop.f32.mrf.mxu0
    %v1245 = vadd.f32 %v1196, %v1244
    %1246 = vmatmul.bf16.gmra.mxu0 %v484
    %v1247 = vpop.f32.mrf.mxu0
    %v1248 = vadd.f32 %v1199, %v1247
    %v1249 = vpop.f32.mrf.mxu0
    %v1250 = vadd.f32 %v1201, %v1249
    %1251 = vdwg.mxu0
    %1252 = vmatpush.bf16.msra.mxu0 %v943
    %1253 = vmatpush.bf16.msra.mxu0 %v941
    %1254 = vmatpush.bf16.msra.mxu0 %v939
    %1255 = vmatpush.bf16.msra.mxu0 %v937
    %1256 = vmatpush.bf16.msra.mxu0 %v935
    %1257 = vmatpush.bf16.msra.mxu0 %v933
    %1258 = vmatpush.bf16.msra.mxu0 %v931
    %1259 = vmatpush.bf16.msra.mxu0 %v929
    %1260 = vmatmul.bf16.gmra.mxu0 %v436
    %v1261 = vpop.f32.mrf.mxu0
    %v1262 = vadd.f32 %v1213, %v1261
    %v1263 = vpop.f32.mrf.mxu0
    %v1264 = vadd.f32 %v1215, %v1263
    %1265 = vmatmul.bf16.gmra.mxu0 %v443
    %v1266 = vpop.f32.mrf.mxu0
    %v1267 = vadd.f32 %v1218, %v1266
    %v1268 = vpop.f32.mrf.mxu0
    %v1269 = vadd.f32 %v1220, %v1268
    %1270 = vmatmul.bf16.gmra.mxu0 %v450
    %v1271 = vpop.f32.mrf.mxu0
    %v1272 = vadd.f32 %v1223, %v1271
    %v1273 = vpop.f32.mrf.mxu0
    %v1274 = vadd.f32 %v1225, %v1273
    %1275 = vmatmul.bf16.gmra.mxu0 %v457
    %v1276 = vpop.f32.mrf.mxu0
    %v1277 = vadd.f32 %v1228, %v1276
    %v1278 = vpop.f32.mrf.mxu0
    %v1279 = vadd.f32 %v1230, %v1278
    %1280 = vmatmul.bf16.gmra.mxu0 %v464
    %v1281 = vpop.f32.mrf.mxu0
    %v1282 = vadd.f32 %v1233, %v1281
    %v1283 = vpop.f32.mrf.mxu0
    %v1284 = vadd.f32 %v1235, %v1283
    %1285 = vmatmul.bf16.gmra.mxu0 %v471
    %v1286 = vpop.f32.mrf.mxu0
    %v1287 = vadd.f32 %v1238, %v1286
    %v1288 = vpop.f32.mrf.mxu0
    %v1289 = vadd.f32 %v1240, %v1288
    %1290 = vmatmul.bf16.gmra.mxu0 %v478
    %v1291 = vpop.f32.mrf.mxu0
    %v1292 = vadd.f32 %v1243, %v1291
    %v1293 = vpop.f32.mrf.mxu0
    %v1294 = vadd.f32 %v1245, %v1293
    %1295 = vmatmul.bf16.gmra.mxu0 %v485
    %v1296 = vpop.f32.mrf.mxu0
    %v1297 = vadd.f32 %v1248, %v1296
    %v1298 = vpop.f32.mrf.mxu0
    %v1299 = vadd.f32 %v1250, %v1298
    %1300 = vdwg.mxu0
    %1301 = vmatpush.bf16.msra.mxu0 %v959
    %1302 = vmatpush.bf16.msra.mxu0 %v957
    %1303 = vmatpush.bf16.msra.mxu0 %v955
    %1304 = vmatpush.bf16.msra.mxu0 %v953
    %1305 = vmatpush.bf16.msra.mxu0 %v951
    %1306 = vmatpush.bf16.msra.mxu0 %v949
    %1307 = vmatpush.bf16.msra.mxu0 %v947
    %1308 = vmatpush.bf16.msra.mxu0 %v945
    %1309 = vmatmul.bf16.gmra.mxu0 %v437
    %v1310 = vpop.f32.mrf.mxu0
    %v1311 = vadd.f32 %v1262, %v1310
    %v1312 = vpop.f32.mrf.mxu0
    %v1313 = vadd.f32 %v1264, %v1312
    %1314 = vmatmul.bf16.gmra.mxu0 %v444
    %v1315 = vpop.f32.mrf.mxu0
    %v1316 = vadd.f32 %v1267, %v1315
    %v1317 = vpop.f32.mrf.mxu0
    %v1318 = vadd.f32 %v1269, %v1317
    %1319 = vmatmul.bf16.gmra.mxu0 %v451
    %v1320 = vpop.f32.mrf.mxu0
    %v1321 = vadd.f32 %v1272, %v1320
    %v1322 = vpop.f32.mrf.mxu0
    %v1323 = vadd.f32 %v1274, %v1322
    %1324 = vmatmul.bf16.gmra.mxu0 %v458
    %v1325 = vpop.f32.mrf.mxu0
    %v1326 = vadd.f32 %v1277, %v1325
    %v1327 = vpop.f32.mrf.mxu0
    %v1328 = vadd.f32 %v1279, %v1327
    %1329 = vmatmul.bf16.gmra.mxu0 %v465
    %v1330 = vpop.f32.mrf.mxu0
    %v1331 = vadd.f32 %v1282, %v1330
    %v1332 = vpop.f32.mrf.mxu0
    %v1333 = vadd.f32 %v1284, %v1332
    %1334 = vmatmul.bf16.gmra.mxu0 %v472
    %v1335 = vpop.f32.mrf.mxu0
    %v1336 = vadd.f32 %v1287, %v1335
    %v1337 = vpop.f32.mrf.mxu0
    %v1338 = vadd.f32 %v1289, %v1337
    %1339 = vmatmul.bf16.gmra.mxu0 %v479
    %v1340 = vpop.f32.mrf.mxu0
    %v1341 = vadd.f32 %v1292, %v1340
    %v1342 = vpop.f32.mrf.mxu0
    %v1343 = vadd.f32 %v1294, %v1342
    %1344 = vmatmul.bf16.gmra.mxu0 %v486
    %v1345 = vpop.f32.mrf.mxu0
    %v1346 = vadd.f32 %v1297, %v1345
    %v1347 = vpop.f32.mrf.mxu0
    %v1348 = vadd.f32 %v1299, %v1347
    %1349 = vdwg.mxu0
    %1350 = vmatpush.bf16.msra.mxu0 %v975
    %1351 = vmatpush.bf16.msra.mxu0 %v973
    %1352 = vmatpush.bf16.msra.mxu0 %v971
    %1353 = vmatpush.bf16.msra.mxu0 %v969
    %1354 = vmatpush.bf16.msra.mxu0 %v967
    %1355 = vmatpush.bf16.msra.mxu0 %v965
    %1356 = vmatpush.bf16.msra.mxu0 %v963
    %1357 = vmatpush.bf16.msra.mxu0 %v961
    %1358 = vmatmul.bf16.gmra.mxu0 %v438
    %v1359 = vpop.f32.mrf.mxu0
    %v1360 = vadd.f32 %v1311, %v1359
    %v1361 = vpop.f32.mrf.mxu0
    %v1362 = vadd.f32 %v1313, %v1361
    %1363 = vmatmul.bf16.gmra.mxu0 %v445
    %v1364 = vpop.f32.mrf.mxu0
    %v1365 = vadd.f32 %v1316, %v1364
    %v1366 = vpop.f32.mrf.mxu0
    %v1367 = vadd.f32 %v1318, %v1366
    %1368 = vmatmul.bf16.gmra.mxu0 %v452
    %v1369 = vpop.f32.mrf.mxu0
    %v1370 = vadd.f32 %v1321, %v1369
    %v1371 = vpop.f32.mrf.mxu0
    %v1372 = vadd.f32 %v1323, %v1371
    %1373 = vmatmul.bf16.gmra.mxu0 %v459
    %v1374 = vpop.f32.mrf.mxu0
    %v1375 = vadd.f32 %v1326, %v1374
    %v1376 = vpop.f32.mrf.mxu0
    %v1377 = vadd.f32 %v1328, %v1376
    %1378 = vmatmul.bf16.gmra.mxu0 %v466
    %v1379 = vpop.f32.mrf.mxu0
    %v1380 = vadd.f32 %v1331, %v1379
    %v1381 = vpop.f32.mrf.mxu0
    %v1382 = vadd.f32 %v1333, %v1381
    %1383 = vmatmul.bf16.gmra.mxu0 %v473
    %v1384 = vpop.f32.mrf.mxu0
    %v1385 = vadd.f32 %v1336, %v1384
    %v1386 = vpop.f32.mrf.mxu0
    %v1387 = vadd.f32 %v1338, %v1386
    %1388 = vmatmul.bf16.gmra.mxu0 %v480
    %v1389 = vpop.f32.mrf.mxu0
    %v1390 = vadd.f32 %v1341, %v1389
    %v1391 = vpop.f32.mrf.mxu0
    %v1392 = vadd.f32 %v1343, %v1391
    %1393 = vmatmul.bf16.gmra.mxu0 %v487
    %v1394 = vpop.f32.mrf.mxu0
    %v1395 = vadd.f32 %v1346, %v1394
    %v1396 = vpop.f32.mrf.mxu0
    %v1397 = vadd.f32 %v1348, %v1396
    %1398 = vdwg.mxu0
    %1399 = vmatpush.bf16.msra.mxu0 %v991
    %1400 = vmatpush.bf16.msra.mxu0 %v989
    %1401 = vmatpush.bf16.msra.mxu0 %v987
    %1402 = vmatpush.bf16.msra.mxu0 %v985
    %1403 = vmatpush.bf16.msra.mxu0 %v983
    %1404 = vmatpush.bf16.msra.mxu0 %v981
    %1405 = vmatpush.bf16.msra.mxu0 %v979
    %1406 = vmatpush.bf16.msra.mxu0 %v977
    %1407 = vmatmul.bf16.gmra.mxu0 %v439
    %v1408 = vpop.f32.mrf.mxu0
    %v1409 = vadd.f32 %v1360, %v1408
    %v1410 = vpop.f32.mrf.mxu0
    %v1411 = vadd.f32 %v1362, %v1410
    %1412 = vmatmul.bf16.gmra.mxu0 %v446
    %v1413 = vpop.f32.mrf.mxu0
    %v1414 = vadd.f32 %v1365, %v1413
    %v1415 = vpop.f32.mrf.mxu0
    %v1416 = vadd.f32 %v1367, %v1415
    %1417 = vmatmul.bf16.gmra.mxu0 %v453
    %v1418 = vpop.f32.mrf.mxu0
    %v1419 = vadd.f32 %v1370, %v1418
    %v1420 = vpop.f32.mrf.mxu0
    %v1421 = vadd.f32 %v1372, %v1420
    %1422 = vmatmul.bf16.gmra.mxu0 %v460
    %v1423 = vpop.f32.mrf.mxu0
    %v1424 = vadd.f32 %v1375, %v1423
    %v1425 = vpop.f32.mrf.mxu0
    %v1426 = vadd.f32 %v1377, %v1425
    %1427 = vmatmul.bf16.gmra.mxu0 %v467
    %v1428 = vpop.f32.mrf.mxu0
    %v1429 = vadd.f32 %v1380, %v1428
    %v1430 = vpop.f32.mrf.mxu0
    %v1431 = vadd.f32 %v1382, %v1430
    %1432 = vmatmul.bf16.gmra.mxu0 %v474
    %v1433 = vpop.f32.mrf.mxu0
    %v1434 = vadd.f32 %v1385, %v1433
    %v1435 = vpop.f32.mrf.mxu0
    %v1436 = vadd.f32 %v1387, %v1435
    %1437 = vmatmul.bf16.gmra.mxu0 %v481
    %v1438 = vpop.f32.mrf.mxu0
    %v1439 = vadd.f32 %v1390, %v1438
    %v1440 = vpop.f32.mrf.mxu0
    %v1441 = vadd.f32 %v1392, %v1440
    %1442 = vmatmul.bf16.gmra.mxu0 %v488
    %v1443 = vpop.f32.mrf.mxu0
    %v1444 = vadd.f32 %v1395, %v1443
    %v1445 = vpop.f32.mrf.mxu0
    %v1446 = vadd.f32 %v1397, %v1445
    %1447 = vdwg.mxu0
    %1448 = vmatpush.bf16.msra.mxu0 %v896
    %1449 = vmatpush.bf16.msra.mxu0 %v894
    %1450 = vmatpush.bf16.msra.mxu0 %v892
    %1451 = vmatpush.bf16.msra.mxu0 %v890
    %1452 = vmatpush.bf16.msra.mxu0 %v888
    %1453 = vmatpush.bf16.msra.mxu0 %v886
    %1454 = vmatpush.bf16.msra.mxu0 %v884
    %1455 = vmatpush.bf16.msra.mxu0 %v882
    %1456 = vmatmul.bf16.gmra.mxu0 %v433
    %v1457 = vpop.f32.mrf.mxu0
    %v1458 = vadd.f32 %v254, %v1457
    %v1459 = vpop.f32.mrf.mxu0
    %v1460 = vadd.f32 %v254, %v1459
    %1461 = vmatmul.bf16.gmra.mxu0 %v440
    %v1462 = vpop.f32.mrf.mxu0
    %v1463 = vadd.f32 %v254, %v1462
    %v1464 = vpop.f32.mrf.mxu0
    %v1465 = vadd.f32 %v254, %v1464
    %1466 = vmatmul.bf16.gmra.mxu0 %v447
    %v1467 = vpop.f32.mrf.mxu0
    %v1468 = vadd.f32 %v254, %v1467
    %v1469 = vpop.f32.mrf.mxu0
    %v1470 = vadd.f32 %v254, %v1469
    %1471 = vmatmul.bf16.gmra.mxu0 %v454
    %v1472 = vpop.f32.mrf.mxu0
    %v1473 = vadd.f32 %v254, %v1472
    %v1474 = vpop.f32.mrf.mxu0
    %v1475 = vadd.f32 %v254, %v1474
    %1476 = vmatmul.bf16.gmra.mxu0 %v461
    %v1477 = vpop.f32.mrf.mxu0
    %v1478 = vadd.f32 %v254, %v1477
    %v1479 = vpop.f32.mrf.mxu0
    %v1480 = vadd.f32 %v254, %v1479
    %1481 = vmatmul.bf16.gmra.mxu0 %v468
    %v1482 = vpop.f32.mrf.mxu0
    %v1483 = vadd.f32 %v254, %v1482
    %v1484 = vpop.f32.mrf.mxu0
    %v1485 = vadd.f32 %v254, %v1484
    %1486 = vmatmul.bf16.gmra.mxu0 %v475
    %v1487 = vpop.f32.mrf.mxu0
    %v1488 = vadd.f32 %v254, %v1487
    %v1489 = vpop.f32.mrf.mxu0
    %v1490 = vadd.f32 %v254, %v1489
    %1491 = vmatmul.bf16.gmra.mxu0 %v482
    %v1492 = vpop.f32.mrf.mxu0
    %v1493 = vadd.f32 %v254, %v1492
    %v1494 = vpop.f32.mrf.mxu0
    %v1495 = vadd.f32 %v254, %v1494
    %1496 = vdwg.mxu0
    %1497 = vmatpush.bf16.msra.mxu0 %v912
    %1498 = vmatpush.bf16.msra.mxu0 %v910
    %1499 = vmatpush.bf16.msra.mxu0 %v908
    %1500 = vmatpush.bf16.msra.mxu0 %v906
    %1501 = vmatpush.bf16.msra.mxu0 %v904
    %1502 = vmatpush.bf16.msra.mxu0 %v902
    %1503 = vmatpush.bf16.msra.mxu0 %v900
    %1504 = vmatpush.bf16.msra.mxu0 %v898
    %1505 = vmatmul.bf16.gmra.mxu0 %v434
    %v1506 = vpop.f32.mrf.mxu0
    %v1507 = vadd.f32 %v1458, %v1506
    %v1508 = vpop.f32.mrf.mxu0
    %v1509 = vadd.f32 %v1460, %v1508
    %1510 = vmatmul.bf16.gmra.mxu0 %v441
    %v1511 = vpop.f32.mrf.mxu0
    %v1512 = vadd.f32 %v1463, %v1511
    %v1513 = vpop.f32.mrf.mxu0
    %v1514 = vadd.f32 %v1465, %v1513
    %1515 = vmatmul.bf16.gmra.mxu0 %v448
    %v1516 = vpop.f32.mrf.mxu0
    %v1517 = vadd.f32 %v1468, %v1516
    %v1518 = vpop.f32.mrf.mxu0
    %v1519 = vadd.f32 %v1470, %v1518
    %1520 = vmatmul.bf16.gmra.mxu0 %v455
    %v1521 = vpop.f32.mrf.mxu0
    %v1522 = vadd.f32 %v1473, %v1521
    %v1523 = vpop.f32.mrf.mxu0
    %v1524 = vadd.f32 %v1475, %v1523
    %1525 = vmatmul.bf16.gmra.mxu0 %v462
    %v1526 = vpop.f32.mrf.mxu0
    %v1527 = vadd.f32 %v1478, %v1526
    %v1528 = vpop.f32.mrf.mxu0
    %v1529 = vadd.f32 %v1480, %v1528
    %1530 = vmatmul.bf16.gmra.mxu0 %v469
    %v1531 = vpop.f32.mrf.mxu0
    %v1532 = vadd.f32 %v1483, %v1531
    %v1533 = vpop.f32.mrf.mxu0
    %v1534 = vadd.f32 %v1485, %v1533
    %1535 = vmatmul.bf16.gmra.mxu0 %v476
    %v1536 = vpop.f32.mrf.mxu0
    %v1537 = vadd.f32 %v1488, %v1536
    %v1538 = vpop.f32.mrf.mxu0
    %v1539 = vadd.f32 %v1490, %v1538
    %1540 = vmatmul.bf16.gmra.mxu0 %v483
    %v1541 = vpop.f32.mrf.mxu0
    %v1542 = vadd.f32 %v1493, %v1541
    %v1543 = vpop.f32.mrf.mxu0
    %v1544 = vadd.f32 %v1495, %v1543
    %1545 = vdwg.mxu0
    %1546 = vmatpush.bf16.msra.mxu0 %v928
    %1547 = vmatpush.bf16.msra.mxu0 %v926
    %1548 = vmatpush.bf16.msra.mxu0 %v924
    %1549 = vmatpush.bf16.msra.mxu0 %v922
    %1550 = vmatpush.bf16.msra.mxu0 %v920
    %1551 = vmatpush.bf16.msra.mxu0 %v918
    %1552 = vmatpush.bf16.msra.mxu0 %v916
    %1553 = vmatpush.bf16.msra.mxu0 %v914
    %1554 = vmatmul.bf16.gmra.mxu0 %v435
    %v1555 = vpop.f32.mrf.mxu0
    %v1556 = vadd.f32 %v1507, %v1555
    %v1557 = vpop.f32.mrf.mxu0
    %v1558 = vadd.f32 %v1509, %v1557
    %1559 = vmatmul.bf16.gmra.mxu0 %v442
    %v1560 = vpop.f32.mrf.mxu0
    %v1561 = vadd.f32 %v1512, %v1560
    %v1562 = vpop.f32.mrf.mxu0
    %v1563 = vadd.f32 %v1514, %v1562
    %1564 = vmatmul.bf16.gmra.mxu0 %v449
    %v1565 = vpop.f32.mrf.mxu0
    %v1566 = vadd.f32 %v1517, %v1565
    %v1567 = vpop.f32.mrf.mxu0
    %v1568 = vadd.f32 %v1519, %v1567
    %1569 = vmatmul.bf16.gmra.mxu0 %v456
    %v1570 = vpop.f32.mrf.mxu0
    %v1571 = vadd.f32 %v1522, %v1570
    %v1572 = vpop.f32.mrf.mxu0
    %v1573 = vadd.f32 %v1524, %v1572
    %1574 = vmatmul.bf16.gmra.mxu0 %v463
    %v1575 = vpop.f32.mrf.mxu0
    %v1576 = vadd.f32 %v1527, %v1575
    %v1577 = vpop.f32.mrf.mxu0
    %v1578 = vadd.f32 %v1529, %v1577
    %1579 = vmatmul.bf16.gmra.mxu0 %v470
    %v1580 = vpop.f32.mrf.mxu0
    %v1581 = vadd.f32 %v1532, %v1580
    %v1582 = vpop.f32.mrf.mxu0
    %v1583 = vadd.f32 %v1534, %v1582
    %1584 = vmatmul.bf16.gmra.mxu0 %v477
    %v1585 = vpop.f32.mrf.mxu0
    %v1586 = vadd.f32 %v1537, %v1585
    %v1587 = vpop.f32.mrf.mxu0
    %v1588 = vadd.f32 %v1539, %v1587
    %1589 = vmatmul.bf16.gmra.mxu0 %v484
    %v1590 = vpop.f32.mrf.mxu0
    %v1591 = vadd.f32 %v1542, %v1590
    %v1592 = vpop.f32.mrf.mxu0
    %v1593 = vadd.f32 %v1544, %v1592
    %1594 = vdwg.mxu0
    %1595 = vmatpush.bf16.msra.mxu0 %v944
    %1596 = vmatpush.bf16.msra.mxu0 %v942
    %1597 = vmatpush.bf16.msra.mxu0 %v940
    %1598 = vmatpush.bf16.msra.mxu0 %v938
    %1599 = vmatpush.bf16.msra.mxu0 %v936
    %1600 = vmatpush.bf16.msra.mxu0 %v934
    %1601 = vmatpush.bf16.msra.mxu0 %v932
    %1602 = vmatpush.bf16.msra.mxu0 %v930
    %1603 = vmatmul.bf16.gmra.mxu0 %v436
    %v1604 = vpop.f32.mrf.mxu0
    %v1605 = vadd.f32 %v1556, %v1604
    %v1606 = vpop.f32.mrf.mxu0
    %v1607 = vadd.f32 %v1558, %v1606
    %1608 = vmatmul.bf16.gmra.mxu0 %v443
    %v1609 = vpop.f32.mrf.mxu0
    %v1610 = vadd.f32 %v1561, %v1609
    %v1611 = vpop.f32.mrf.mxu0
    %v1612 = vadd.f32 %v1563, %v1611
    %1613 = vmatmul.bf16.gmra.mxu0 %v450
    %v1614 = vpop.f32.mrf.mxu0
    %v1615 = vadd.f32 %v1566, %v1614
    %v1616 = vpop.f32.mrf.mxu0
    %v1617 = vadd.f32 %v1568, %v1616
    %1618 = vmatmul.bf16.gmra.mxu0 %v457
    %v1619 = vpop.f32.mrf.mxu0
    %v1620 = vadd.f32 %v1571, %v1619
    %v1621 = vpop.f32.mrf.mxu0
    %v1622 = vadd.f32 %v1573, %v1621
    %1623 = vmatmul.bf16.gmra.mxu0 %v464
    %v1624 = vpop.f32.mrf.mxu0
    %v1625 = vadd.f32 %v1576, %v1624
    %v1626 = vpop.f32.mrf.mxu0
    %v1627 = vadd.f32 %v1578, %v1626
    %1628 = vmatmul.bf16.gmra.mxu0 %v471
    %v1629 = vpop.f32.mrf.mxu0
    %v1630 = vadd.f32 %v1581, %v1629
    %v1631 = vpop.f32.mrf.mxu0
    %v1632 = vadd.f32 %v1583, %v1631
    %1633 = vmatmul.bf16.gmra.mxu0 %v478
    %v1634 = vpop.f32.mrf.mxu0
    %v1635 = vadd.f32 %v1586, %v1634
    %v1636 = vpop.f32.mrf.mxu0
    %v1637 = vadd.f32 %v1588, %v1636
    %1638 = vmatmul.bf16.gmra.mxu0 %v485
    %v1639 = vpop.f32.mrf.mxu0
    %v1640 = vadd.f32 %v1591, %v1639
    %v1641 = vpop.f32.mrf.mxu0
    %v1642 = vadd.f32 %v1593, %v1641
    %1643 = vdwg.mxu0
    %1644 = vmatpush.bf16.msra.mxu0 %v960
    %1645 = vmatpush.bf16.msra.mxu0 %v958
    %1646 = vmatpush.bf16.msra.mxu0 %v956
    %1647 = vmatpush.bf16.msra.mxu0 %v954
    %1648 = vmatpush.bf16.msra.mxu0 %v952
    %1649 = vmatpush.bf16.msra.mxu0 %v950
    %1650 = vmatpush.bf16.msra.mxu0 %v948
    %1651 = vmatpush.bf16.msra.mxu0 %v946
    %1652 = vmatmul.bf16.gmra.mxu0 %v437
    %v1653 = vpop.f32.mrf.mxu0
    %v1654 = vadd.f32 %v1605, %v1653
    %v1655 = vpop.f32.mrf.mxu0
    %v1656 = vadd.f32 %v1607, %v1655
    %1657 = vmatmul.bf16.gmra.mxu0 %v444
    %v1658 = vpop.f32.mrf.mxu0
    %v1659 = vadd.f32 %v1610, %v1658
    %v1660 = vpop.f32.mrf.mxu0
    %v1661 = vadd.f32 %v1612, %v1660
    %1662 = vmatmul.bf16.gmra.mxu0 %v451
    %v1663 = vpop.f32.mrf.mxu0
    %v1664 = vadd.f32 %v1615, %v1663
    %v1665 = vpop.f32.mrf.mxu0
    %v1666 = vadd.f32 %v1617, %v1665
    %1667 = vmatmul.bf16.gmra.mxu0 %v458
    %v1668 = vpop.f32.mrf.mxu0
    %v1669 = vadd.f32 %v1620, %v1668
    %v1670 = vpop.f32.mrf.mxu0
    %v1671 = vadd.f32 %v1622, %v1670
    %1672 = vmatmul.bf16.gmra.mxu0 %v465
    %v1673 = vpop.f32.mrf.mxu0
    %v1674 = vadd.f32 %v1625, %v1673
    %v1675 = vpop.f32.mrf.mxu0
    %v1676 = vadd.f32 %v1627, %v1675
    %1677 = vmatmul.bf16.gmra.mxu0 %v472
    %v1678 = vpop.f32.mrf.mxu0
    %v1679 = vadd.f32 %v1630, %v1678
    %v1680 = vpop.f32.mrf.mxu0
    %v1681 = vadd.f32 %v1632, %v1680
    %1682 = vmatmul.bf16.gmra.mxu0 %v479
    %v1683 = vpop.f32.mrf.mxu0
    %v1684 = vadd.f32 %v1635, %v1683
    %v1685 = vpop.f32.mrf.mxu0
    %v1686 = vadd.f32 %v1637, %v1685
    %1687 = vmatmul.bf16.gmra.mxu0 %v486
    %v1688 = vpop.f32.mrf.mxu0
    %v1689 = vadd.f32 %v1640, %v1688
    %v1690 = vpop.f32.mrf.mxu0
    %v1691 = vadd.f32 %v1642, %v1690
    %1692 = vdwg.mxu0
    %1693 = vmatpush.bf16.msra.mxu0 %v976
    %1694 = vmatpush.bf16.msra.mxu0 %v974
    %1695 = vmatpush.bf16.msra.mxu0 %v972
    %1696 = vmatpush.bf16.msra.mxu0 %v970
    %1697 = vmatpush.bf16.msra.mxu0 %v968
    %1698 = vmatpush.bf16.msra.mxu0 %v966
    %1699 = vmatpush.bf16.msra.mxu0 %v964
    %1700 = vmatpush.bf16.msra.mxu0 %v962
    %1701 = vmatmul.bf16.gmra.mxu0 %v438
    %v1702 = vpop.f32.mrf.mxu0
    %v1703 = vadd.f32 %v1654, %v1702
    %v1704 = vpop.f32.mrf.mxu0
    %v1705 = vadd.f32 %v1656, %v1704
    %1706 = vmatmul.bf16.gmra.mxu0 %v445
    %v1707 = vpop.f32.mrf.mxu0
    %v1708 = vadd.f32 %v1659, %v1707
    %v1709 = vpop.f32.mrf.mxu0
    %v1710 = vadd.f32 %v1661, %v1709
    %1711 = vmatmul.bf16.gmra.mxu0 %v452
    %v1712 = vpop.f32.mrf.mxu0
    %v1713 = vadd.f32 %v1664, %v1712
    %v1714 = vpop.f32.mrf.mxu0
    %v1715 = vadd.f32 %v1666, %v1714
    %1716 = vmatmul.bf16.gmra.mxu0 %v459
    %v1717 = vpop.f32.mrf.mxu0
    %v1718 = vadd.f32 %v1669, %v1717
    %v1719 = vpop.f32.mrf.mxu0
    %v1720 = vadd.f32 %v1671, %v1719
    %1721 = vmatmul.bf16.gmra.mxu0 %v466
    %v1722 = vpop.f32.mrf.mxu0
    %v1723 = vadd.f32 %v1674, %v1722
    %v1724 = vpop.f32.mrf.mxu0
    %v1725 = vadd.f32 %v1676, %v1724
    %1726 = vmatmul.bf16.gmra.mxu0 %v473
    %v1727 = vpop.f32.mrf.mxu0
    %v1728 = vadd.f32 %v1679, %v1727
    %v1729 = vpop.f32.mrf.mxu0
    %v1730 = vadd.f32 %v1681, %v1729
    %1731 = vmatmul.bf16.gmra.mxu0 %v480
    %v1732 = vpop.f32.mrf.mxu0
    %v1733 = vadd.f32 %v1684, %v1732
    %v1734 = vpop.f32.mrf.mxu0
    %v1735 = vadd.f32 %v1686, %v1734
    %1736 = vmatmul.bf16.gmra.mxu0 %v487
    %v1737 = vpop.f32.mrf.mxu0
    %v1738 = vadd.f32 %v1689, %v1737
    %v1739 = vpop.f32.mrf.mxu0
    %v1740 = vadd.f32 %v1691, %v1739
    %1741 = vdwg.mxu0
    %1742 = vmatpush.bf16.msra.mxu0 %v992
    %1743 = vmatpush.bf16.msra.mxu0 %v990
    %1744 = vmatpush.bf16.msra.mxu0 %v988
    %1745 = vmatpush.bf16.msra.mxu0 %v986
    %1746 = vmatpush.bf16.msra.mxu0 %v984
    %1747 = vmatpush.bf16.msra.mxu0 %v982
    %1748 = vmatpush.bf16.msra.mxu0 %v980
    %1749 = vmatpush.bf16.msra.mxu0 %v978
    %1750 = vmatmul.bf16.gmra.mxu0 %v439
    %v1751 = vpop.f32.mrf.mxu0
    %v1752 = vadd.f32 %v1703, %v1751
    %v1753 = vpop.f32.mrf.mxu0
    %v1754 = vadd.f32 %v1705, %v1753
    %1755 = vmatmul.bf16.gmra.mxu0 %v446
    %v1756 = vpop.f32.mrf.mxu0
    %v1757 = vadd.f32 %v1708, %v1756
    %v1758 = vpop.f32.mrf.mxu0
    %v1759 = vadd.f32 %v1710, %v1758
    %1760 = vmatmul.bf16.gmra.mxu0 %v453
    %v1761 = vpop.f32.mrf.mxu0
    %v1762 = vadd.f32 %v1713, %v1761
    %v1763 = vpop.f32.mrf.mxu0
    %v1764 = vadd.f32 %v1715, %v1763
    %1765 = vmatmul.bf16.gmra.mxu0 %v460
    %v1766 = vpop.f32.mrf.mxu0
    %v1767 = vadd.f32 %v1718, %v1766
    %v1768 = vpop.f32.mrf.mxu0
    %v1769 = vadd.f32 %v1720, %v1768
    %1770 = vmatmul.bf16.gmra.mxu0 %v467
    %v1771 = vpop.f32.mrf.mxu0
    %v1772 = vadd.f32 %v1723, %v1771
    %v1773 = vpop.f32.mrf.mxu0
    %v1774 = vadd.f32 %v1725, %v1773
    %1775 = vmatmul.bf16.gmra.mxu0 %v474
    %v1776 = vpop.f32.mrf.mxu0
    %v1777 = vadd.f32 %v1728, %v1776
    %v1778 = vpop.f32.mrf.mxu0
    %v1779 = vadd.f32 %v1730, %v1778
    %1780 = vmatmul.bf16.gmra.mxu0 %v481
    %v1781 = vpop.f32.mrf.mxu0
    %v1782 = vadd.f32 %v1733, %v1781
    %v1783 = vpop.f32.mrf.mxu0
    %v1784 = vadd.f32 %v1735, %v1783
    %1785 = vmatmul.bf16.gmra.mxu0 %v488
    %v1786 = vpop.f32.mrf.mxu0
    %v1787 = vadd.f32 %v1738, %v1786
    %v1788 = vpop.f32.mrf.mxu0
    %v1789 = vadd.f32 %v1740, %v1788
    %1790 = vdwg.mxu0
    %vm1791 = vcmp.gt.f32.partialorder %v1409, 0.0
    %vm1792 = vcmp.gt.f32.partialorder %v1752, 0.0
    %vm1793 = vcmp.gt.f32.partialorder %v1411, 0.0
    %vm1794 = vcmp.gt.f32.partialorder %v1754, 0.0
    %vm1795 = vcmp.gt.f32.partialorder %v1414, 0.0
    %vm1796 = vcmp.gt.f32.partialorder %v1757, 0.0
    %vm1797 = vcmp.gt.f32.partialorder %v1416, 0.0
    %vm1798 = vcmp.gt.f32.partialorder %v1759, 0.0
    %vm1799 = vcmp.gt.f32.partialorder %v1419, 0.0
    %vm1800 = vcmp.gt.f32.partialorder %v1762, 0.0
    %vm1801 = vcmp.gt.f32.partialorder %v1421, 0.0
    %vm1802 = vcmp.gt.f32.partialorder %v1764, 0.0
    %vm1803 = vcmp.gt.f32.partialorder %v1424, 0.0
    %vm1804 = vcmp.gt.f32.partialorder %v1767, 0.0
    %vm1805 = vcmp.gt.f32.partialorder %v1426, 0.0
    %vm1806 = vcmp.gt.f32.partialorder %v1769, 0.0
    %vm1807 = vcmp.gt.f32.partialorder %v1429, 0.0
    %vm1808 = vcmp.gt.f32.partialorder %v1772, 0.0
    %vm1809 = vcmp.gt.f32.partialorder %v1431, 0.0
    %vm1810 = vcmp.gt.f32.partialorder %v1774, 0.0
    %vm1811 = vcmp.gt.f32.partialorder %v1434, 0.0
    %vm1812 = vcmp.gt.f32.partialorder %v1777, 0.0
    %vm1813 = vcmp.gt.f32.partialorder %v1436, 0.0
    %vm1814 = vcmp.gt.f32.partialorder %v1779, 0.0
    %vm1815 = vcmp.gt.f32.partialorder %v1439, 0.0
    %vm1816 = vcmp.gt.f32.partialorder %v1782, 0.0
    %vm1817 = vcmp.gt.f32.partialorder %v1441, 0.0
    %vm1818 = vcmp.gt.f32.partialorder %v1784, 0.0
    %vm1819 = vcmp.gt.f32.partialorder %v1444, 0.0
    %vm1820 = vcmp.gt.f32.partialorder %v1787, 0.0
    %vm1821 = vcmp.gt.f32.partialorder %v1446, 0.0
    %vm1822 = vcmp.gt.f32.partialorder %v1789, 0.0
    %v1823 = vmul.f32 %v1409, 0.2
    %v1824 = vmul.f32 %v1752, 0.2
    %v1825 = vmul.f32 %v1411, 0.2
    %v1826 = vmul.f32 %v1754, 0.2
    %v1827 = vmul.f32 %v1414, 0.2
    %v1828 = vmul.f32 %v1757, 0.2
    %v1829 = vmul.f32 %v1416, 0.2
    %v1830 = vmul.f32 %v1759, 0.2
    %v1831 = vmul.f32 %v1419, 0.2
    %v1832 = vmul.f32 %v1762, 0.2
    %v1833 = vmul.f32 %v1421, 0.2
    %v1834 = vmul.f32 %v1764, 0.2
    %v1835 = vmul.f32 %v1424, 0.2
    %v1836 = vmul.f32 %v1767, 0.2
    %v1837 = vmul.f32 %v1426, 0.2
    %v1838 = vmul.f32 %v1769, 0.2
    %v1839 = vmul.f32 %v1429, 0.2
    %v1840 = vmul.f32 %v1772, 0.2
    %v1841 = vmul.f32 %v1431, 0.2
    %v1842 = vmul.f32 %v1774, 0.2
    %v1843 = vmul.f32 %v1434, 0.2
    %v1844 = vmul.f32 %v1777, 0.2
    %v1845 = vmul.f32 %v1436, 0.2
    %v1846 = vmul.f32 %v1779, 0.2
    %v1847 = vmul.f32 %v1439, 0.2
    %v1848 = vmul.f32 %v1782, 0.2
    %v1849 = vmul.f32 %v1441, 0.2
    %v1850 = vmul.f32 %v1784, 0.2
    %v1851 = vmul.f32 %v1444, 0.2
    %v1852 = vmul.f32 %v1787, 0.2
    %v1853 = vmul.f32 %v1446, 0.2
    %v1854 = vmul.f32 %v1789, 0.2
    %v1855 = vsel %vm1791, %v1409, %v1823
    %v1856 = vsel %vm1792, %v1752, %v1824
    %v1857 = vsel %vm1793, %v1411, %v1825
    %v1858 = vsel %vm1794, %v1754, %v1826
    %v1859 = vsel %vm1795, %v1414, %v1827
    %v1860 = vsel %vm1796, %v1757, %v1828
    %v1861 = vsel %vm1797, %v1416, %v1829
    %v1862 = vsel %vm1798, %v1759, %v1830
    %v1863 = vsel %vm1799, %v1419, %v1831
    %v1864 = vsel %vm1800, %v1762, %v1832
    %v1865 = vsel %vm1801, %v1421, %v1833
    %v1866 = vsel %vm1802, %v1764, %v1834
    %v1867 = vsel %vm1803, %v1424, %v1835
    %v1868 = vsel %vm1804, %v1767, %v1836
    %v1869 = vsel %vm1805, %v1426, %v1837
    %v1870 = vsel %vm1806, %v1769, %v1838
    %v1871 = vsel %vm1807, %v1429, %v1839
    %v1872 = vsel %vm1808, %v1772, %v1840
    %v1873 = vsel %vm1809, %v1431, %v1841
    %v1874 = vsel %vm1810, %v1774, %v1842
    %v1875 = vsel %vm1811, %v1434, %v1843
    %v1876 = vsel %vm1812, %v1777, %v1844
    %v1877 = vsel %vm1813, %v1436, %v1845
    %v1878 = vsel %vm1814, %v1779, %v1846
    %v1879 = vsel %vm1815, %v1439, %v1847
    %v1880 = vsel %vm1816, %v1782, %v1848
    %v1881 = vsel %vm1817, %v1441, %v1849
    %v1882 = vsel %vm1818, %v1784, %v1850
    %v1883 = vsel %vm1819, %v1444, %v1851
    %v1884 = vsel %vm1820, %v1787, %v1852
    %v1885 = vsel %vm1821, %v1446, %v1853
    %v1886 = vsel %vm1822, %v1789, %v1854
    %v1887 = vpack.c.bf16 %v1857, %v1855
    %v1888 = vpack.c.bf16 %v1858, %v1856
    %v1889 = vpack.c.bf16 %v1861, %v1859
    %v1890 = vpack.c.bf16 %v1862, %v1860
    %v1891 = vpack.c.bf16 %v1865, %v1863
    %v1892 = vpack.c.bf16 %v1866, %v1864
    %v1893 = vpack.c.bf16 %v1869, %v1867
    %v1894 = vpack.c.bf16 %v1870, %v1868
    %v1895 = vpack.c.bf16 %v1873, %v1871
    %v1896 = vpack.c.bf16 %v1874, %v1872
    %v1897 = vpack.c.bf16 %v1877, %v1875
    %v1898 = vpack.c.bf16 %v1878, %v1876
    %v1899 = vpack.c.bf16 %v1881, %v1879
    %v1900 = vpack.c.bf16 %v1882, %v1880
    %v1901 = vpack.c.bf16 %v1885, %v1883
    %v1902 = vpack.c.bf16 %v1886, %v1884
    %v1903 = vld [vmem:[#allocation7] sm:$0xff]
    %v1904 = vld [vmem:[#allocation7 + $0x8] sm:$0xff]
    %v1905 = vld [vmem:[#allocation7 + $0x10] sm:$0xff]
    %v1906 = vld [vmem:[#allocation7 + $0x18] sm:$0xff]
    %v1907 = vld [vmem:[#allocation7 + $0x20] sm:$0xff]
    %v1908 = vld [vmem:[#allocation7 + $0x28] sm:$0xff]
    %v1909 = vld [vmem:[#allocation7 + $0x30] sm:$0xff]
    %v1910 = vld [vmem:[#allocation7 + $0x38] sm:$0xff]
    %v1911 = vld [vmem:[#allocation7 + $0x40] sm:$0xff]
    %v1912 = vld [vmem:[#allocation7 + $0x48] sm:$0xff]
    %v1913 = vld [vmem:[#allocation7 + $0x50] sm:$0xff]
    %v1914 = vld [vmem:[#allocation7 + $0x58] sm:$0xff]
    %v1915 = vld [vmem:[#allocation7 + $0x60] sm:$0xff]
    %v1916 = vld [vmem:[#allocation7 + $0x68] sm:$0xff]
    %v1917 = vld [vmem:[#allocation7 + $0x70] sm:$0xff]
    %v1918 = vld [vmem:[#allocation7 + $0x78] sm:$0xff]
    %v1919 = vld [vmem:[#allocation7 + $0x80] sm:$0xff]
    %v1920 = vld [vmem:[#allocation7 + $0x88] sm:$0xff]
    %v1921 = vld [vmem:[#allocation7 + $0x90] sm:$0xff]
    %v1922 = vld [vmem:[#allocation7 + $0x98] sm:$0xff]
    %v1923 = vld [vmem:[#allocation7 + $0xa0] sm:$0xff]
    %v1924 = vld [vmem:[#allocation7 + $0xa8] sm:$0xff]
    %v1925 = vld [vmem:[#allocation7 + $0xb0] sm:$0xff]
    %v1926 = vld [vmem:[#allocation7 + $0xb8] sm:$0xff]
    %v1927 = vld [vmem:[#allocation7 + $0xc0] sm:$0xff]
    %v1928 = vld [vmem:[#allocation7 + $0xc8] sm:$0xff]
    %v1929 = vld [vmem:[#allocation7 + $0xd0] sm:$0xff]
    %v1930 = vld [vmem:[#allocation7 + $0xd8] sm:$0xff]
    %v1931 = vld [vmem:[#allocation7 + $0xe0] sm:$0xff]
    %v1932 = vld [vmem:[#allocation7 + $0xe8] sm:$0xff]
    %v1933 = vld [vmem:[#allocation7 + $0xf0] sm:$0xff]
    %v1934 = vld [vmem:[#allocation7 + $0xf8] sm:$0xff]
    %v1935 = vld [vmem:[%s4] sm:$0x3]
    %v1937 = vperm.slane %v1935, 0
    %v1938 = vperm.slane %v1935, 1
    %v1973 = vunpack.c.l.b16 %v1903
    %v1974 = vunpack.c.h.b16 %v1903
    %v1975 = vunpack.c.l.b16 %v1904
    %v1976 = vunpack.c.h.b16 %v1904
    %v1977 = vunpack.c.l.b16 %v1905
    %v1978 = vunpack.c.h.b16 %v1905
    %v1979 = vunpack.c.l.b16 %v1906
    %v1980 = vunpack.c.h.b16 %v1906
    %v1981 = vunpack.c.l.b16 %v1907
    %v1982 = vunpack.c.h.b16 %v1907
    %v1983 = vunpack.c.l.b16 %v1908
    %v1984 = vunpack.c.h.b16 %v1908
    %v1985 = vunpack.c.l.b16 %v1909
    %v1986 = vunpack.c.h.b16 %v1909
    %v1987 = vunpack.c.l.b16 %v1910
    %v1988 = vunpack.c.h.b16 %v1910
    %v1989 = vunpack.c.l.b16 %v1911
    %v1990 = vunpack.c.h.b16 %v1911
    %v1991 = vunpack.c.l.b16 %v1912
    %v1992 = vunpack.c.h.b16 %v1912
    %v1993 = vunpack.c.l.b16 %v1913
    %v1994 = vunpack.c.h.b16 %v1913
    %v1995 = vunpack.c.l.b16 %v1914
    %v1996 = vunpack.c.h.b16 %v1914
    %v1997 = vunpack.c.l.b16 %v1915
    %v1998 = vunpack.c.h.b16 %v1915
    %v1999 = vunpack.c.l.b16 %v1916
    %v2000 = vunpack.c.h.b16 %v1916
    %v2001 = vunpack.c.l.b16 %v1917
    %v2002 = vunpack.c.h.b16 %v1917
    %v2003 = vunpack.c.l.b16 %v1918
    %v2004 = vunpack.c.h.b16 %v1918
    %v2005 = vunpack.c.l.b16 %v1919
    %v2006 = vunpack.c.h.b16 %v1919
    %v2007 = vunpack.c.l.b16 %v1920
    %v2008 = vunpack.c.h.b16 %v1920
    %v2009 = vunpack.c.l.b16 %v1921
    %v2010 = vunpack.c.h.b16 %v1921
    %v2011 = vunpack.c.l.b16 %v1922
    %v2012 = vunpack.c.h.b16 %v1922
    %v2013 = vunpack.c.l.b16 %v1923
    %v2014 = vunpack.c.h.b16 %v1923
    %v2015 = vunpack.c.l.b16 %v1924
    %v2016 = vunpack.c.h.b16 %v1924
    %v2017 = vunpack.c.l.b16 %v1925
    %v2018 = vunpack.c.h.b16 %v1925
    %v2019 = vunpack.c.l.b16 %v1926
    %v2020 = vunpack.c.h.b16 %v1926
    %v2021 = vunpack.c.l.b16 %v1927
    %v2022 = vunpack.c.h.b16 %v1927
    %v2023 = vunpack.c.l.b16 %v1928
    %v2024 = vunpack.c.h.b16 %v1928
    %v2025 = vunpack.c.l.b16 %v1929
    %v2026 = vunpack.c.h.b16 %v1929
    %v2027 = vunpack.c.l.b16 %v1930
    %v2028 = vunpack.c.h.b16 %v1930
    %v2029 = vunpack.c.l.b16 %v1931
    %v2030 = vunpack.c.h.b16 %v1931
    %v2031 = vunpack.c.l.b16 %v1932
    %v2032 = vunpack.c.h.b16 %v1932
    %v2033 = vunpack.c.l.b16 %v1933
    %v2034 = vunpack.c.h.b16 %v1933
    %v2035 = vunpack.c.l.b16 %v1934
    %v2036 = vunpack.c.h.b16 %v1934
    %v2037 = vpack.c.b16 %v1975, %v1973
    %v2038 = vpack.c.b16 %v1976, %v1974
    %v2039 = vpack.c.b16 %v1979, %v1977
    %v2040 = vpack.c.b16 %v1980, %v1978
    %v2041 = vpack.c.b16 %v1983, %v1981
    %v2042 = vpack.c.b16 %v1984, %v1982
    %v2043 = vpack.c.b16 %v1987, %v1985
    %v2044 = vpack.c.b16 %v1988, %v1986
    %v2045 = vpack.c.b16 %v1991, %v1989
    %v2046 = vpack.c.b16 %v1992, %v1990
    %v2047 = vpack.c.b16 %v1995, %v1993
    %v2048 = vpack.c.b16 %v1996, %v1994
    %v2049 = vpack.c.b16 %v1999, %v1997
    %v2050 = vpack.c.b16 %v2000, %v1998
    %v2051 = vpack.c.b16 %v2003, %v2001
    %v2052 = vpack.c.b16 %v2004, %v2002
    %v2053 = vpack.c.b16 %v2007, %v2005
    %v2054 = vpack.c.b16 %v2008, %v2006
    %v2055 = vpack.c.b16 %v2011, %v2009
    %v2056 = vpack.c.b16 %v2012, %v2010
    %v2057 = vpack.c.b16 %v2015, %v2013
    %v2058 = vpack.c.b16 %v2016, %v2014
    %v2059 = vpack.c.b16 %v2019, %v2017
    %v2060 = vpack.c.b16 %v2020, %v2018
    %v2061 = vpack.c.b16 %v2023, %v2021
    %v2062 = vpack.c.b16 %v2024, %v2022
    %v2063 = vpack.c.b16 %v2027, %v2025
    %v2064 = vpack.c.b16 %v2028, %v2026
    %v2065 = vpack.c.b16 %v2031, %v2029
    %v2066 = vpack.c.b16 %v2032, %v2030
    %v2067 = vpack.c.b16 %v2035, %v2033
    %v2068 = vpack.c.b16 %v2036, %v2034
    %2101 = vmatpush.bf16.msra.mxu0 %v2051
    %2102 = vmatpush.bf16.msra.mxu0 %v2049
    %2103 = vmatpush.bf16.msra.mxu0 %v2047
    %2104 = vmatpush.bf16.msra.mxu0 %v2045
    %2105 = vmatpush.bf16.msra.mxu0 %v2043
    %2106 = vmatpush.bf16.msra.mxu0 %v2041
    %2107 = vmatpush.bf16.msra.mxu0 %v2039
    %2108 = vmatpush.bf16.msra.mxu0 %v2037
    %2109 = vmatmul.bf16.gmra.mxu0 %v1887
    %v2110 = vpop.f32.mrf.mxu0
    %v2111 = vadd.f32 %v1937, %v2110
    %v2112 = vpop.f32.mrf.mxu0
    %v2113 = vadd.f32 %v1937, %v2112
    %2114 = vmatmul.bf16.gmra.mxu0 %v1889
    %v2115 = vpop.f32.mrf.mxu0
    %v2116 = vadd.f32 %v1937, %v2115
    %v2117 = vpop.f32.mrf.mxu0
    %v2118 = vadd.f32 %v1937, %v2117
    %2119 = vmatmul.bf16.gmra.mxu0 %v1891
    %v2120 = vpop.f32.mrf.mxu0
    %v2121 = vadd.f32 %v1937, %v2120
    %v2122 = vpop.f32.mrf.mxu0
    %v2123 = vadd.f32 %v1937, %v2122
    %2124 = vmatmul.bf16.gmra.mxu0 %v1893
    %v2125 = vpop.f32.mrf.mxu0
    %v2126 = vadd.f32 %v1937, %v2125
    %v2127 = vpop.f32.mrf.mxu0
    %v2128 = vadd.f32 %v1937, %v2127
    %2129 = vmatmul.bf16.gmra.mxu0 %v1895
    %v2130 = vpop.f32.mrf.mxu0
    %v2131 = vadd.f32 %v1937, %v2130
    %v2132 = vpop.f32.mrf.mxu0
    %v2133 = vadd.f32 %v1937, %v2132
    %2134 = vmatmul.bf16.gmra.mxu0 %v1897
    %v2135 = vpop.f32.mrf.mxu0
    %v2136 = vadd.f32 %v1937, %v2135
    %v2137 = vpop.f32.mrf.mxu0
    %v2138 = vadd.f32 %v1937, %v2137
    %2139 = vmatmul.bf16.gmra.mxu0 %v1899
    %v2140 = vpop.f32.mrf.mxu0
    %v2141 = vadd.f32 %v1937, %v2140
    %v2142 = vpop.f32.mrf.mxu0
    %v2143 = vadd.f32 %v1937, %v2142
    %2144 = vmatmul.bf16.gmra.mxu0 %v1901
    %v2145 = vpop.f32.mrf.mxu0
    %v2146 = vadd.f32 %v1937, %v2145
    %v2147 = vpop.f32.mrf.mxu0
    %v2148 = vadd.f32 %v1937, %v2147
    %2149 = vdwg.mxu0
    %2150 = vmatpush.bf16.msra.mxu0 %v2067
    %2151 = vmatpush.bf16.msra.mxu0 %v2065
    %2152 = vmatpush.bf16.msra.mxu0 %v2063
    %2153 = vmatpush.bf16.msra.mxu0 %v2061
    %2154 = vmatpush.bf16.msra.mxu0 %v2059
    %2155 = vmatpush.bf16.msra.mxu0 %v2057
    %2156 = vmatpush.bf16.msra.mxu0 %v2055
    %2157 = vmatpush.bf16.msra.mxu0 %v2053
    %2158 = vmatmul.bf16.gmra.mxu0 %v1888
    %v2159 = vpop.f32.mrf.mxu0
    %v2160 = vadd.f32 %v2111, %v2159
    %v2161 = vpop.f32.mrf.mxu0
    %v2162 = vadd.f32 %v2113, %v2161
    %2163 = vmatmul.bf16.gmra.mxu0 %v1890
    %v2164 = vpop.f32.mrf.mxu0
    %v2165 = vadd.f32 %v2116, %v2164
    %v2166 = vpop.f32.mrf.mxu0
    %v2167 = vadd.f32 %v2118, %v2166
    %2168 = vmatmul.bf16.gmra.mxu0 %v1892
    %v2169 = vpop.f32.mrf.mxu0
    %v2170 = vadd.f32 %v2121, %v2169
    %v2171 = vpop.f32.mrf.mxu0
    %v2172 = vadd.f32 %v2123, %v2171
    %2173 = vmatmul.bf16.gmra.mxu0 %v1894
    %v2174 = vpop.f32.mrf.mxu0
    %v2175 = vadd.f32 %v2126, %v2174
    %v2176 = vpop.f32.mrf.mxu0
    %v2177 = vadd.f32 %v2128, %v2176
    %2178 = vmatmul.bf16.gmra.mxu0 %v1896
    %v2179 = vpop.f32.mrf.mxu0
    %v2180 = vadd.f32 %v2131, %v2179
    %v2181 = vpop.f32.mrf.mxu0
    %v2182 = vadd.f32 %v2133, %v2181
    %2183 = vmatmul.bf16.gmra.mxu0 %v1898
    %v2184 = vpop.f32.mrf.mxu0
    %v2185 = vadd.f32 %v2136, %v2184
    %v2186 = vpop.f32.mrf.mxu0
    %v2187 = vadd.f32 %v2138, %v2186
    %2188 = vmatmul.bf16.gmra.mxu0 %v1900
    %v2189 = vpop.f32.mrf.mxu0
    %v2190 = vadd.f32 %v2141, %v2189
    %v2191 = vpop.f32.mrf.mxu0
    %v2192 = vadd.f32 %v2143, %v2191
    %2193 = vmatmul.bf16.gmra.mxu0 %v1902
    %v2194 = vpop.f32.mrf.mxu0
    %v2195 = vadd.f32 %v2146, %v2194
    %v2196 = vpop.f32.mrf.mxu0
    %v2197 = vadd.f32 %v2148, %v2196
    %2198 = vdwg.mxu0
    %2199 = vmatpush.bf16.msra.mxu0 %v2052
    %2200 = vmatpush.bf16.msra.mxu0 %v2050
    %2201 = vmatpush.bf16.msra.mxu0 %v2048
    %2202 = vmatpush.bf16.msra.mxu0 %v2046
    %2203 = vmatpush.bf16.msra.mxu0 %v2044
    %2204 = vmatpush.bf16.msra.mxu0 %v2042
    %2205 = vmatpush.bf16.msra.mxu0 %v2040
    %2206 = vmatpush.bf16.msra.mxu0 %v2038
    %2207 = vmatmul.bf16.gmra.mxu0 %v1887
    %v2208 = vpop.f32.mrf.mxu0
    %v2209 = vadd.f32 %v1938, %v2208
    %v2210 = vpop.f32.mrf.mxu0
    %v2211 = vadd.f32 %v1938, %v2210
    %2212 = vmatmul.bf16.gmra.mxu0 %v1889
    %v2213 = vpop.f32.mrf.mxu0
    %v2214 = vadd.f32 %v1938, %v2213
    %v2215 = vpop.f32.mrf.mxu0
    %v2216 = vadd.f32 %v1938, %v2215
    %2217 = vmatmul.bf16.gmra.mxu0 %v1891
    %v2218 = vpop.f32.mrf.mxu0
    %v2219 = vadd.f32 %v1938, %v2218
    %v2220 = vpop.f32.mrf.mxu0
    %v2221 = vadd.f32 %v1938, %v2220
    %2222 = vmatmul.bf16.gmra.mxu0 %v1893
    %v2223 = vpop.f32.mrf.mxu0
    %v2224 = vadd.f32 %v1938, %v2223
    %v2225 = vpop.f32.mrf.mxu0
    %v2226 = vadd.f32 %v1938, %v2225
    %2227 = vmatmul.bf16.gmra.mxu0 %v1895
    %v2228 = vpop.f32.mrf.mxu0
    %v2229 = vadd.f32 %v1938, %v2228
    %v2230 = vpop.f32.mrf.mxu0
    %v2231 = vadd.f32 %v1938, %v2230
    %2232 = vmatmul.bf16.gmra.mxu0 %v1897
    %v2233 = vpop.f32.mrf.mxu0
    %v2234 = vadd.f32 %v1938, %v2233
    %v2235 = vpop.f32.mrf.mxu0
    %v2236 = vadd.f32 %v1938, %v2235
    %2237 = vmatmul.bf16.gmra.mxu0 %v1899
    %v2238 = vpop.f32.mrf.mxu0
    %v2239 = vadd.f32 %v1938, %v2238
    %v2240 = vpop.f32.mrf.mxu0
    %v2241 = vadd.f32 %v1938, %v2240
    %2242 = vmatmul.bf16.gmra.mxu0 %v1901
    %v2243 = vpop.f32.mrf.mxu0
    %v2244 = vadd.f32 %v1938, %v2243
    %v2245 = vpop.f32.mrf.mxu0
    %v2246 = vadd.f32 %v1938, %v2245
    %2247 = vdwg.mxu0
    %2248 = vmatpush.bf16.msra.mxu0 %v2068
    %2249 = vmatpush.bf16.msra.mxu0 %v2066
    %2250 = vmatpush.bf16.msra.mxu0 %v2064
    %2251 = vmatpush.bf16.msra.mxu0 %v2062
    %2252 = vmatpush.bf16.msra.mxu0 %v2060
    %2253 = vmatpush.bf16.msra.mxu0 %v2058
    %2254 = vmatpush.bf16.msra.mxu0 %v2056
    %2255 = vmatpush.bf16.msra.mxu0 %v2054
    %2256 = vmatmul.bf16.gmra.mxu0 %v1888
    %v2257 = vpop.f32.mrf.mxu0
    %v2258 = vadd.f32 %v2209, %v2257
    %v2259 = vpop.f32.mrf.mxu0
    %v2260 = vadd.f32 %v2211, %v2259
    %2261 = vmatmul.bf16.gmra.mxu0 %v1890
    %v2262 = vpop.f32.mrf.mxu0
    %v2263 = vadd.f32 %v2214, %v2262
    %v2264 = vpop.f32.mrf.mxu0
    %v2265 = vadd.f32 %v2216, %v2264
    %2266 = vmatmul.bf16.gmra.mxu0 %v1892
    %v2267 = vpop.f32.mrf.mxu0
    %v2268 = vadd.f32 %v2219, %v2267
    %v2269 = vpop.f32.mrf.mxu0
    %v2270 = vadd.f32 %v2221, %v2269
    %2271 = vmatmul.bf16.gmra.mxu0 %v1894
    %v2272 = vpop.f32.mrf.mxu0
    %v2273 = vadd.f32 %v2224, %v2272
    %v2274 = vpop.f32.mrf.mxu0
    %v2275 = vadd.f32 %v2226, %v2274
    %2276 = vmatmul.bf16.gmra.mxu0 %v1896
    %v2277 = vpop.f32.mrf.mxu0
    %v2278 = vadd.f32 %v2229, %v2277
    %v2279 = vpop.f32.mrf.mxu0
    %v2280 = vadd.f32 %v2231, %v2279
    %2281 = vmatmul.bf16.gmra.mxu0 %v1898
    %v2282 = vpop.f32.mrf.mxu0
    %v2283 = vadd.f32 %v2234, %v2282
    %v2284 = vpop.f32.mrf.mxu0
    %v2285 = vadd.f32 %v2236, %v2284
    %2286 = vmatmul.bf16.gmra.mxu0 %v1900
    %v2287 = vpop.f32.mrf.mxu0
    %v2288 = vadd.f32 %v2239, %v2287
    %v2289 = vpop.f32.mrf.mxu0
    %v2290 = vadd.f32 %v2241, %v2289
    %2291 = vmatmul.bf16.gmra.mxu0 %v1902
    %v2292 = vpop.f32.mrf.mxu0
    %v2293 = vadd.f32 %v2244, %v2292
    %v2294 = vpop.f32.mrf.mxu0
    %v2295 = vadd.f32 %v2246, %v2294
    %2296 = vdwg.mxu0
    %vm2297 = vcmp.gt.f32.partialorder %v2160, 0.0
    %vm2298 = vcmp.gt.f32.partialorder %v2258, 0.0
    %vm2299 = vcmp.gt.f32.partialorder %v2162, 0.0
    %vm2300 = vcmp.gt.f32.partialorder %v2260, 0.0
    %vm2301 = vcmp.gt.f32.partialorder %v2165, 0.0
    %vm2302 = vcmp.gt.f32.partialorder %v2263, 0.0
    %vm2303 = vcmp.gt.f32.partialorder %v2167, 0.0
    %vm2304 = vcmp.gt.f32.partialorder %v2265, 0.0
    %vm2305 = vcmp.gt.f32.partialorder %v2170, 0.0
    %vm2306 = vcmp.gt.f32.partialorder %v2268, 0.0
    %vm2307 = vcmp.gt.f32.partialorder %v2172, 0.0
    %vm2308 = vcmp.gt.f32.partialorder %v2270, 0.0
    %vm2309 = vcmp.gt.f32.partialorder %v2175, 0.0
    %vm2310 = vcmp.gt.f32.partialorder %v2273, 0.0
    %vm2311 = vcmp.gt.f32.partialorder %v2177, 0.0
    %vm2312 = vcmp.gt.f32.partialorder %v2275, 0.0
    %vm2313 = vcmp.gt.f32.partialorder %v2180, 0.0
    %vm2314 = vcmp.gt.f32.partialorder %v2278, 0.0
    %vm2315 = vcmp.gt.f32.partialorder %v2182, 0.0
    %vm2316 = vcmp.gt.f32.partialorder %v2280, 0.0
    %vm2317 = vcmp.gt.f32.partialorder %v2185, 0.0
    %vm2318 = vcmp.gt.f32.partialorder %v2283, 0.0
    %vm2319 = vcmp.gt.f32.partialorder %v2187, 0.0
    %vm2320 = vcmp.gt.f32.partialorder %v2285, 0.0
    %vm2321 = vcmp.gt.f32.partialorder %v2190, 0.0
    %vm2322 = vcmp.gt.f32.partialorder %v2288, 0.0
    %vm2323 = vcmp.gt.f32.partialorder %v2192, 0.0
    %vm2324 = vcmp.gt.f32.partialorder %v2290, 0.0
    %vm2325 = vcmp.gt.f32.partialorder %v2195, 0.0
    %vm2326 = vcmp.gt.f32.partialorder %v2293, 0.0
    %vm2327 = vcmp.gt.f32.partialorder %v2197, 0.0
    %vm2328 = vcmp.gt.f32.partialorder %v2295, 0.0
    %v2329 = vmul.f32 %v2160, 0.2
    %v2330 = vmul.f32 %v2258, 0.2
    %v2331 = vmul.f32 %v2162, 0.2
    %v2332 = vmul.f32 %v2260, 0.2
    %v2333 = vmul.f32 %v2165, 0.2
    %v2334 = vmul.f32 %v2263, 0.2
    %v2335 = vmul.f32 %v2167, 0.2
    %v2336 = vmul.f32 %v2265, 0.2
    %v2337 = vmul.f32 %v2170, 0.2
    %v2338 = vmul.f32 %v2268, 0.2
    %v2339 = vmul.f32 %v2172, 0.2
    %v2340 = vmul.f32 %v2270, 0.2
    %v2341 = vmul.f32 %v2175, 0.2
    %v2342 = vmul.f32 %v2273, 0.2
    %v2343 = vmul.f32 %v2177, 0.2
    %v2344 = vmul.f32 %v2275, 0.2
    %v2345 = vmul.f32 %v2180, 0.2
    %v2346 = vmul.f32 %v2278, 0.2
    %v2347 = vmul.f32 %v2182, 0.2
    %v2348 = vmul.f32 %v2280, 0.2
    %v2349 = vmul.f32 %v2185, 0.2
    %v2350 = vmul.f32 %v2283, 0.2
    %v2351 = vmul.f32 %v2187, 0.2
    %v2352 = vmul.f32 %v2285, 0.2
    %v2353 = vmul.f32 %v2190, 0.2
    %v2354 = vmul.f32 %v2288, 0.2
    %v2355 = vmul.f32 %v2192, 0.2
    %v2356 = vmul.f32 %v2290, 0.2
    %v2357 = vmul.f32 %v2195, 0.2
    %v2358 = vmul.f32 %v2293, 0.2
    %v2359 = vmul.f32 %v2197, 0.2
    %v2360 = vmul.f32 %v2295, 0.2
    %v2361 = vsel %vm2297, %v2160, %v2329
    %v2362 = vsel %vm2298, %v2258, %v2330
    %v2363 = vsel %vm2299, %v2162, %v2331
    %v2364 = vsel %vm2300, %v2260, %v2332
    %v2365 = vsel %vm2301, %v2165, %v2333
    %v2366 = vsel %vm2302, %v2263, %v2334
    %v2367 = vsel %vm2303, %v2167, %v2335
    %v2368 = vsel %vm2304, %v2265, %v2336
    %v2369 = vsel %vm2305, %v2170, %v2337
    %v2370 = vsel %vm2306, %v2268, %v2338
    %v2371 = vsel %vm2307, %v2172, %v2339
    %v2372 = vsel %vm2308, %v2270, %v2340
    %v2373 = vsel %vm2309, %v2175, %v2341
    %v2374 = vsel %vm2310, %v2273, %v2342
    %v2375 = vsel %vm2311, %v2177, %v2343
    %v2376 = vsel %vm2312, %v2275, %v2344
    %v2377 = vsel %vm2313, %v2180, %v2345
    %v2378 = vsel %vm2314, %v2278, %v2346
    %v2379 = vsel %vm2315, %v2182, %v2347
    %v2380 = vsel %vm2316, %v2280, %v2348
    %v2381 = vsel %vm2317, %v2185, %v2349
    %v2382 = vsel %vm2318, %v2283, %v2350
    %v2383 = vsel %vm2319, %v2187, %v2351
    %v2384 = vsel %vm2320, %v2285, %v2352
    %v2385 = vsel %vm2321, %v2190, %v2353
    %v2386 = vsel %vm2322, %v2288, %v2354
    %v2387 = vsel %vm2323, %v2192, %v2355
    %v2388 = vsel %vm2324, %v2290, %v2356
    %v2389 = vsel %vm2325, %v2195, %v2357
    %v2390 = vsel %vm2326, %v2293, %v2358
    %v2391 = vsel %vm2327, %v2197, %v2359
    %v2392 = vsel %vm2328, %v2295, %v2360
    %v2393 = vld [vmem:[%s5] sm:$0x3]
    %v2395 = vperm.slane %v2393, 0
    %v2396 = vperm.slane %v2393, 1
    %v2399 = vmul.f32 %v2361, %v2395
    %v2400 = vmul.f32 %v2362, %v2396
    %v2401 = vmul.f32 %v2363, %v2395
    %v2402 = vmul.f32 %v2364, %v2396
    %v2403 = vmul.f32 %v2365, %v2395
    %v2404 = vmul.f32 %v2366, %v2396
    %v2405 = vmul.f32 %v2367, %v2395
    %v2406 = vmul.f32 %v2368, %v2396
    %v2407 = vmul.f32 %v2369, %v2395
    %v2408 = vmul.f32 %v2370, %v2396
    %v2409 = vmul.f32 %v2371, %v2395
    %v2410 = vmul.f32 %v2372, %v2396
    %v2411 = vmul.f32 %v2373, %v2395
    %v2412 = vmul.f32 %v2374, %v2396
    %v2413 = vmul.f32 %v2375, %v2395
    %v2414 = vmul.f32 %v2376, %v2396
    %v2415 = vmul.f32 %v2377, %v2395
    %v2416 = vmul.f32 %v2378, %v2396
    %v2417 = vmul.f32 %v2379, %v2395
    %v2418 = vmul.f32 %v2380, %v2396
    %v2419 = vmul.f32 %v2381, %v2395
    %v2420 = vmul.f32 %v2382, %v2396
    %v2421 = vmul.f32 %v2383, %v2395
    %v2422 = vmul.f32 %v2384, %v2396
    %v2423 = vmul.f32 %v2385, %v2395
    %v2424 = vmul.f32 %v2386, %v2396
    %v2425 = vmul.f32 %v2387, %v2395
    %v2426 = vmul.f32 %v2388, %v2396
    %v2427 = vmul.f32 %v2389, %v2395
    %v2428 = vmul.f32 %v2390, %v2396
    %v2429 = vmul.f32 %v2391, %v2395
    %v2430 = vmul.f32 %v2392, %v2396
    %v2431 = vadd.f32 %v2399, %v2400
    %2432 = vadd.xlane.f32.xlu0 %v2431
    %v2433 = vpop.xlane.xlu0 %2432
    %v2434 = vadd.f32 %v2401, %v2402
    %2435 = vadd.xlane.f32.xlu0 %v2434
    %v2436 = vpop.xlane.xlu0 %2435
    %v2437 = vadd.f32 %v2403, %v2404
    %2438 = vadd.xlane.f32.xlu0 %v2437
    %v2439 = vpop.xlane.xlu0 %2438
    %v2440 = vadd.f32 %v2405, %v2406
    %2441 = vadd.xlane.f32.xlu0 %v2440
    %v2442 = vpop.xlane.xlu0 %2441
    %v2443 = vadd.f32 %v2407, %v2408
    %2444 = vadd.xlane.f32.xlu0 %v2443
    %v2445 = vpop.xlane.xlu0 %2444
    %v2446 = vadd.f32 %v2409, %v2410
    %2447 = vadd.xlane.f32.xlu0 %v2446
    %v2448 = vpop.xlane.xlu0 %2447
    %v2449 = vadd.f32 %v2411, %v2412
    %2450 = vadd.xlane.f32.xlu0 %v2449
    %v2451 = vpop.xlane.xlu0 %2450
    %v2452 = vadd.f32 %v2413, %v2414
    %2453 = vadd.xlane.f32.xlu0 %v2452
    %v2454 = vpop.xlane.xlu0 %2453
    %v2455 = vadd.f32 %v2415, %v2416
    %2456 = vadd.xlane.f32.xlu0 %v2455
    %v2457 = vpop.xlane.xlu0 %2456
    %v2458 = vadd.f32 %v2417, %v2418
    %2459 = vadd.xlane.f32.xlu0 %v2458
    %v2460 = vpop.xlane.xlu0 %2459
    %v2461 = vadd.f32 %v2419, %v2420
    %2462 = vadd.xlane.f32.xlu0 %v2461
    %v2463 = vpop.xlane.xlu0 %2462
    %v2464 = vadd.f32 %v2421, %v2422
    %2465 = vadd.xlane.f32.xlu0 %v2464
    %v2466 = vpop.xlane.xlu0 %2465
    %v2467 = vadd.f32 %v2423, %v2424
    %2468 = vadd.xlane.f32.xlu0 %v2467
    %v2469 = vpop.xlane.xlu0 %2468
    %v2470 = vadd.f32 %v2425, %v2426
    %2471 = vadd.xlane.f32.xlu0 %v2470
    %v2472 = vpop.xlane.xlu0 %2471
    %v2473 = vadd.f32 %v2427, %v2428
    %2474 = vadd.xlane.f32.xlu0 %v2473
    %v2475 = vpop.xlane.xlu0 %2474
    %v2476 = vadd.f32 %v2429, %v2430
    %2477 = vadd.xlane.f32.xlu0 %v2476
    %v2478 = vpop.xlane.xlu0 %2477
    %v2479 = vld [vmem:[#allocation2] sm:$0x1]
    %v2481 = vperm.slane %v2479, 0
    %v2483 = vadd.f32 %v2433, %v2481
    %v2484 = vadd.f32 %v2436, %v2481
    %v2485 = vadd.f32 %v2439, %v2481
    %v2486 = vadd.f32 %v2442, %v2481
    %v2487 = vadd.f32 %v2445, %v2481
    %v2488 = vadd.f32 %v2448, %v2481
    %v2489 = vadd.f32 %v2451, %v2481
    %v2490 = vadd.f32 %v2454, %v2481
    %v2491 = vadd.f32 %v2457, %v2481
    %v2492 = vadd.f32 %v2460, %v2481
    %v2493 = vadd.f32 %v2463, %v2481
    %v2494 = vadd.f32 %v2466, %v2481
    %v2495 = vadd.f32 %v2469, %v2481
    %v2496 = vadd.f32 %v2472, %v2481
    %v2497 = vadd.f32 %v2475, %v2481
    %v2498 = vadd.f32 %v2478, %v2481
    %v2499 = vxor.u32 %v2483, 2147483648
    %v2500 = vxor.u32 %v2484, 2147483648
    %v2501 = vxor.u32 %v2485, 2147483648
    %v2502 = vxor.u32 %v2486, 2147483648
    %v2503 = vxor.u32 %v2487, 2147483648
    %v2504 = vxor.u32 %v2488, 2147483648
    %v2505 = vxor.u32 %v2489, 2147483648
    %v2506 = vxor.u32 %v2490, 2147483648
    %v2507 = vxor.u32 %v2491, 2147483648
    %v2508 = vxor.u32 %v2492, 2147483648
    %v2509 = vxor.u32 %v2493, 2147483648
    %v2510 = vxor.u32 %v2494, 2147483648
    %v2511 = vxor.u32 %v2495, 2147483648
    %v2512 = vxor.u32 %v2496, 2147483648
    %v2513 = vxor.u32 %v2497, 2147483648
    %v2514 = vxor.u32 %v2498, 2147483648
    %v2515 = vmul.f32 %v2499, 1.442695
    %v2516 = vpow.pop %v2515
    %v2517 = vmul.f32 %v2500, 1.442695
    %v2518 = vpow.pop %v2517
    %v2519 = vmul.f32 %v2501, 1.442695
    %v2520 = vpow.pop %v2519
    %v2521 = vmul.f32 %v2502, 1.442695
    %v2522 = vpow.pop %v2521
    %v2523 = vmul.f32 %v2503, 1.442695
    %v2524 = vpow.pop %v2523
    %v2525 = vmul.f32 %v2504, 1.442695
    %v2526 = vpow.pop %v2525
    %v2527 = vmul.f32 %v2505, 1.442695
    %v2528 = vpow.pop %v2527
    %v2529 = vmul.f32 %v2506, 1.442695
    %v2530 = vpow.pop %v2529
    %v2531 = vmul.f32 %v2507, 1.442695
    %v2532 = vpow.pop %v2531
    %v2533 = vmul.f32 %v2508, 1.442695
    %v2534 = vpow.pop %v2533
    %v2535 = vmul.f32 %v2509, 1.442695
    %v2536 = vpow.pop %v2535
    %v2537 = vmul.f32 %v2510, 1.442695
    %v2538 = vpow.pop %v2537
    %v2539 = vmul.f32 %v2511, 1.442695
    %v2540 = vpow.pop %v2539
    %v2541 = vmul.f32 %v2512, 1.442695
    %v2542 = vpow.pop %v2541
    %v2543 = vmul.f32 %v2513, 1.442695
    %v2544 = vpow.pop %v2543
    %v2545 = vmul.f32 %v2514, 1.442695
    %v2546 = vpow.pop %v2545
    %v2547 = vadd.f32 %v2516, 1.0
    %v2548 = vadd.f32 %v2518, 1.0
    %v2549 = vadd.f32 %v2520, 1.0
    %v2550 = vadd.f32 %v2522, 1.0
    %v2551 = vadd.f32 %v2524, 1.0
    %v2552 = vadd.f32 %v2526, 1.0
    %v2553 = vadd.f32 %v2528, 1.0
    %v2554 = vadd.f32 %v2530, 1.0
    %v2555 = vadd.f32 %v2532, 1.0
    %v2556 = vadd.f32 %v2534, 1.0
    %v2557 = vadd.f32 %v2536, 1.0
    %v2558 = vadd.f32 %v2538, 1.0
    %v2559 = vadd.f32 %v2540, 1.0
    %v2560 = vadd.f32 %v2542, 1.0
    %v2561 = vadd.f32 %v2544, 1.0
    %v2562 = vadd.f32 %v2546, 1.0
    %v2563 = vrcp.pop %v2547
    %v2564 = vmul.f32 %v2547, %v2563
    %v2565 = vsub.f32 1.0, %v2564
    %v2566 = vmul.f32 %v2563, %v2565
    %v2567 = vadd.f32 %v2563, %v2566
    %vm2568 = vweird.f32 %v2547
    %vm2569 = vweird.f32 %v2563
    %vm2570 = vmor %vm2568, %vm2569
    %v2571 = vsel %vm2570, %v2563, %v2567
    %v2572 = vand.u32 2147483647, %v2547
    %vm2573 = vcmp.eq.f32.partialorder %v2572, 8.507059e+37
    %v2574 = vand.u32 %v2547, 2147483648
    %v2575 = vor.u32 1.1754944e-38, %v2574
    %v2576 = vsel %vm2573, %v2575, %v2571
    %v2577 = vmul.f32 1.0, %v2576
    %v2578 = vrcp.pop %v2548
    %v2579 = vmul.f32 %v2548, %v2578
    %v2580 = vsub.f32 1.0, %v2579
    %v2581 = vmul.f32 %v2578, %v2580
    %v2582 = vadd.f32 %v2578, %v2581
    %vm2583 = vweird.f32 %v2548
    %vm2584 = vweird.f32 %v2578
    %vm2585 = vmor %vm2583, %vm2584
    %v2586 = vsel %vm2585, %v2578, %v2582
    %v2587 = vand.u32 2147483647, %v2548
    %vm2588 = vcmp.eq.f32.partialorder %v2587, 8.507059e+37
    %v2589 = vand.u32 %v2548, 2147483648
    %v2590 = vor.u32 1.1754944e-38, %v2589
    %v2591 = vsel %vm2588, %v2590, %v2586
    %v2592 = vmul.f32 1.0, %v2591
    %v2593 = vrcp.pop %v2549
    %v2594 = vmul.f32 %v2549, %v2593
    %v2595 = vsub.f32 1.0, %v2594
    %v2596 = vmul.f32 %v2593, %v2595
    %v2597 = vadd.f32 %v2593, %v2596
    %vm2598 = vweird.f32 %v2549
    %vm2599 = vweird.f32 %v2593
    %vm2600 = vmor %vm2598, %vm2599
    %v2601 = vsel %vm2600, %v2593, %v2597
    %v2602 = vand.u32 2147483647, %v2549
    %vm2603 = vcmp.eq.f32.partialorder %v2602, 8.507059e+37
    %v2604 = vand.u32 %v2549, 2147483648
    %v2605 = vor.u32 1.1754944e-38, %v2604
    %v2606 = vsel %vm2603, %v2605, %v2601
    %v2607 = vmul.f32 1.0, %v2606
    %v2608 = vrcp.pop %v2550
    %v2609 = vmul.f32 %v2550, %v2608
    %v2610 = vsub.f32 1.0, %v2609
    %v2611 = vmul.f32 %v2608, %v2610
    %v2612 = vadd.f32 %v2608, %v2611
    %vm2613 = vweird.f32 %v2550
    %vm2614 = vweird.f32 %v2608
    %vm2615 = vmor %vm2613, %vm2614
    %v2616 = vsel %vm2615, %v2608, %v2612
    %v2617 = vand.u32 2147483647, %v2550
    %vm2618 = vcmp.eq.f32.partialorder %v2617, 8.507059e+37
    %v2619 = vand.u32 %v2550, 2147483648
    %v2620 = vor.u32 1.1754944e-38, %v2619
    %v2621 = vsel %vm2618, %v2620, %v2616
    %v2622 = vmul.f32 1.0, %v2621
    %v2623 = vrcp.pop %v2551
    %v2624 = vmul.f32 %v2551, %v2623
    %v2625 = vsub.f32 1.0, %v2624
    %v2626 = vmul.f32 %v2623, %v2625
    %v2627 = vadd.f32 %v2623, %v2626
    %vm2628 = vweird.f32 %v2551
    %vm2629 = vweird.f32 %v2623
    %vm2630 = vmor %vm2628, %vm2629
    %v2631 = vsel %vm2630, %v2623, %v2627
    %v2632 = vand.u32 2147483647, %v2551
    %vm2633 = vcmp.eq.f32.partialorder %v2632, 8.507059e+37
    %v2634 = vand.u32 %v2551, 2147483648
    %v2635 = vor.u32 1.1754944e-38, %v2634
    %v2636 = vsel %vm2633, %v2635, %v2631
    %v2637 = vmul.f32 1.0, %v2636
    %v2638 = vrcp.pop %v2552
    %v2639 = vmul.f32 %v2552, %v2638
    %v2640 = vsub.f32 1.0, %v2639
    %v2641 = vmul.f32 %v2638, %v2640
    %v2642 = vadd.f32 %v2638, %v2641
    %vm2643 = vweird.f32 %v2552
    %vm2644 = vweird.f32 %v2638
    %vm2645 = vmor %vm2643, %vm2644
    %v2646 = vsel %vm2645, %v2638, %v2642
    %v2647 = vand.u32 2147483647, %v2552
    %vm2648 = vcmp.eq.f32.partialorder %v2647, 8.507059e+37
    %v2649 = vand.u32 %v2552, 2147483648
    %v2650 = vor.u32 1.1754944e-38, %v2649
    %v2651 = vsel %vm2648, %v2650, %v2646
    %v2652 = vmul.f32 1.0, %v2651
    %v2653 = vrcp.pop %v2553
    %v2654 = vmul.f32 %v2553, %v2653
    %v2655 = vsub.f32 1.0, %v2654
    %v2656 = vmul.f32 %v2653, %v2655
    %v2657 = vadd.f32 %v2653, %v2656
    %vm2658 = vweird.f32 %v2553
    %vm2659 = vweird.f32 %v2653
    %vm2660 = vmor %vm2658, %vm2659
    %v2661 = vsel %vm2660, %v2653, %v2657
    %v2662 = vand.u32 2147483647, %v2553
    %vm2663 = vcmp.eq.f32.partialorder %v2662, 8.507059e+37
    %v2664 = vand.u32 %v2553, 2147483648
    %v2665 = vor.u32 1.1754944e-38, %v2664
    %v2666 = vsel %vm2663, %v2665, %v2661
    %v2667 = vmul.f32 1.0, %v2666
    %v2668 = vrcp.pop %v2554
    %v2669 = vmul.f32 %v2554, %v2668
    %v2670 = vsub.f32 1.0, %v2669
    %v2671 = vmul.f32 %v2668, %v2670
    %v2672 = vadd.f32 %v2668, %v2671
    %vm2673 = vweird.f32 %v2554
    %vm2674 = vweird.f32 %v2668
    %vm2675 = vmor %vm2673, %vm2674
    %v2676 = vsel %vm2675, %v2668, %v2672
    %v2677 = vand.u32 2147483647, %v2554
    %vm2678 = vcmp.eq.f32.partialorder %v2677, 8.507059e+37
    %v2679 = vand.u32 %v2554, 2147483648
    %v2680 = vor.u32 1.1754944e-38, %v2679
    %v2681 = vsel %vm2678, %v2680, %v2676
    %v2682 = vmul.f32 1.0, %v2681
    %v2683 = vrcp.pop %v2555
    %v2684 = vmul.f32 %v2555, %v2683
    %v2685 = vsub.f32 1.0, %v2684
    %v2686 = vmul.f32 %v2683, %v2685
    %v2687 = vadd.f32 %v2683, %v2686
    %vm2688 = vweird.f32 %v2555
    %vm2689 = vweird.f32 %v2683
    %vm2690 = vmor %vm2688, %vm2689
    %v2691 = vsel %vm2690, %v2683, %v2687
    %v2692 = vand.u32 2147483647, %v2555
    %vm2693 = vcmp.eq.f32.partialorder %v2692, 8.507059e+37
    %v2694 = vand.u32 %v2555, 2147483648
    %v2695 = vor.u32 1.1754944e-38, %v2694
    %v2696 = vsel %vm2693, %v2695, %v2691
    %v2697 = vmul.f32 1.0, %v2696
    %v2698 = vrcp.pop %v2556
    %v2699 = vmul.f32 %v2556, %v2698
    %v2700 = vsub.f32 1.0, %v2699
    %v2701 = vmul.f32 %v2698, %v2700
    %v2702 = vadd.f32 %v2698, %v2701
    %vm2703 = vweird.f32 %v2556
    %vm2704 = vweird.f32 %v2698
    %vm2705 = vmor %vm2703, %vm2704
    %v2706 = vsel %vm2705, %v2698, %v2702
    %v2707 = vand.u32 2147483647, %v2556
    %vm2708 = vcmp.eq.f32.partialorder %v2707, 8.507059e+37
    %v2709 = vand.u32 %v2556, 2147483648
    %v2710 = vor.u32 1.1754944e-38, %v2709
    %v2711 = vsel %vm2708, %v2710, %v2706
    %v2712 = vmul.f32 1.0, %v2711
    %v2713 = vrcp.pop %v2557
    %v2714 = vmul.f32 %v2557, %v2713
    %v2715 = vsub.f32 1.0, %v2714
    %v2716 = vmul.f32 %v2713, %v2715
    %v2717 = vadd.f32 %v2713, %v2716
    %vm2718 = vweird.f32 %v2557
    %vm2719 = vweird.f32 %v2713
    %vm2720 = vmor %vm2718, %vm2719
    %v2721 = vsel %vm2720, %v2713, %v2717
    %v2722 = vand.u32 2147483647, %v2557
    %vm2723 = vcmp.eq.f32.partialorder %v2722, 8.507059e+37
    %v2724 = vand.u32 %v2557, 2147483648
    %v2725 = vor.u32 1.1754944e-38, %v2724
    %v2726 = vsel %vm2723, %v2725, %v2721
    %v2727 = vmul.f32 1.0, %v2726
    %v2728 = vrcp.pop %v2558
    %v2729 = vmul.f32 %v2558, %v2728
    %v2730 = vsub.f32 1.0, %v2729
    %v2731 = vmul.f32 %v2728, %v2730
    %v2732 = vadd.f32 %v2728, %v2731
    %vm2733 = vweird.f32 %v2558
    %vm2734 = vweird.f32 %v2728
    %vm2735 = vmor %vm2733, %vm2734
    %v2736 = vsel %vm2735, %v2728, %v2732
    %v2737 = vand.u32 2147483647, %v2558
    %vm2738 = vcmp.eq.f32.partialorder %v2737, 8.507059e+37
    %v2739 = vand.u32 %v2558, 2147483648
    %v2740 = vor.u32 1.1754944e-38, %v2739
    %v2741 = vsel %vm2738, %v2740, %v2736
    %v2742 = vmul.f32 1.0, %v2741
    %v2743 = vrcp.pop %v2559
    %v2744 = vmul.f32 %v2559, %v2743
    %v2745 = vsub.f32 1.0, %v2744
    %v2746 = vmul.f32 %v2743, %v2745
    %v2747 = vadd.f32 %v2743, %v2746
    %vm2748 = vweird.f32 %v2559
    %vm2749 = vweird.f32 %v2743
    %vm2750 = vmor %vm2748, %vm2749
    %v2751 = vsel %vm2750, %v2743, %v2747
    %v2752 = vand.u32 2147483647, %v2559
    %vm2753 = vcmp.eq.f32.partialorder %v2752, 8.507059e+37
    %v2754 = vand.u32 %v2559, 2147483648
    %v2755 = vor.u32 1.1754944e-38, %v2754
    %v2756 = vsel %vm2753, %v2755, %v2751
    %v2757 = vmul.f32 1.0, %v2756
    %v2758 = vrcp.pop %v2560
    %v2759 = vmul.f32 %v2560, %v2758
    %v2760 = vsub.f32 1.0, %v2759
    %v2761 = vmul.f32 %v2758, %v2760
    %v2762 = vadd.f32 %v2758, %v2761
    %vm2763 = vweird.f32 %v2560
    %vm2764 = vweird.f32 %v2758
    %vm2765 = vmor %vm2763, %vm2764
    %v2766 = vsel %vm2765, %v2758, %v2762
    %v2767 = vand.u32 2147483647, %v2560
    %vm2768 = vcmp.eq.f32.partialorder %v2767, 8.507059e+37
    %v2769 = vand.u32 %v2560, 2147483648
    %v2770 = vor.u32 1.1754944e-38, %v2769
    %v2771 = vsel %vm2768, %v2770, %v2766
    %v2772 = vmul.f32 1.0, %v2771
    %v2773 = vrcp.pop %v2561
    %v2774 = vmul.f32 %v2561, %v2773
    %v2775 = vsub.f32 1.0, %v2774
    %v2776 = vmul.f32 %v2773, %v2775
    %v2777 = vadd.f32 %v2773, %v2776
    %vm2778 = vweird.f32 %v2561
    %vm2779 = vweird.f32 %v2773
    %vm2780 = vmor %vm2778, %vm2779
    %v2781 = vsel %vm2780, %v2773, %v2777
    %v2782 = vand.u32 2147483647, %v2561
    %vm2783 = vcmp.eq.f32.partialorder %v2782, 8.507059e+37
    %v2784 = vand.u32 %v2561, 2147483648
    %v2785 = vor.u32 1.1754944e-38, %v2784
    %v2786 = vsel %vm2783, %v2785, %v2781
    %v2787 = vmul.f32 1.0, %v2786
    %v2788 = vrcp.pop %v2562
    %v2789 = vmul.f32 %v2562, %v2788
    %v2790 = vsub.f32 1.0, %v2789
    %v2791 = vmul.f32 %v2788, %v2790
    %v2792 = vadd.f32 %v2788, %v2791
    %vm2793 = vweird.f32 %v2562
    %vm2794 = vweird.f32 %v2788
    %vm2795 = vmor %vm2793, %vm2794
    %v2796 = vsel %vm2795, %v2788, %v2792
    %v2797 = vand.u32 2147483647, %v2562
    %vm2798 = vcmp.eq.f32.partialorder %v2797, 8.507059e+37
    %v2799 = vand.u32 %v2562, 2147483648
    %v2800 = vor.u32 1.1754944e-38, %v2799
    %v2801 = vsel %vm2798, %v2800, %v2796
    %v2802 = vmul.f32 1.0, %v2801
    %vm2803 = vcmask 7168
    %2804 = vst.msk [vmem:[%s7] sm:$0xff] %vm2803, %v2577
    %2805 = vst.msk [vmem:[%s7 + $0x8] sm:$0xff] %vm2803, %v2592
    %2806 = vst.msk [vmem:[%s7 + $0x10] sm:$0xff] %vm2803, %v2607
    %2807 = vst.msk [vmem:[%s7 + $0x18] sm:$0xff] %vm2803, %v2622
    %2808 = vst.msk [vmem:[%s7 + $0x20] sm:$0xff] %vm2803, %v2637
    %2809 = vst.msk [vmem:[%s7 + $0x28] sm:$0xff] %vm2803, %v2652
    %2810 = vst.msk [vmem:[%s7 + $0x30] sm:$0xff] %vm2803, %v2667
    %2811 = vst.msk [vmem:[%s7 + $0x38] sm:$0xff] %vm2803, %v2682
    %2812 = vst.msk [vmem:[%s7 + $0x40] sm:$0xff] %vm2803, %v2697
    %2813 = vst.msk [vmem:[%s7 + $0x48] sm:$0xff] %vm2803, %v2712
    %2814 = vst.msk [vmem:[%s7 + $0x50] sm:$0xff] %vm2803, %v2727
    %2815 = vst.msk [vmem:[%s7 + $0x58] sm:$0xff] %vm2803, %v2742
    %2816 = vst.msk [vmem:[%s7 + $0x60] sm:$0xff] %vm2803, %v2757
    %2817 = vst.msk [vmem:[%s7 + $0x68] sm:$0xff] %vm2803, %v2772
    %2818 = vst.msk [vmem:[%s7 + $0x70] sm:$0xff] %vm2803, %v2787
    %2819 = vst.msk [vmem:[%s7 + $0x78] sm:$0xff] %vm2803, %v2802
    // Predicated region
    $region42: #{tpu_custom_call.1} parent=1 // pred_check
      _
    $region43: #{tpu_custom_call.1} parent=1 // pred_check_branch
      %2821 = sbr.rel (0) target = $region45
    $region44: #{tpu_custom_call.1} parent=1 // pred_region
      _
    $region45: #{tpu_custom_call.1} parent=1 // pred_fallthru
      _
    // Predicated region
    $region46: #{tpu_custom_call.1} parent=1 // pred_check
      _
    $region47: #{tpu_custom_call.1} parent=1 // pred_check_branch
      %2823 = sbr.rel (0) target = $region49
    $region48: #{tpu_custom_call.1} parent=1 // pred_region
      _
    $region49: #{tpu_custom_call.1} parent=1 // pred_fallthru
      _
    %2824 = vsyncpa [#allocation4], 1
    %2825 = vsyncpa [#allocation6], 1

</llo_original>
